<compile_context>
chip_gen: v6e
topology: v6e:2x2x1
jax: 0.10.0
libtpu: 0.0.40
codegen_flags: <defaults>
</compile_context>

<pallas_src>
import functools

import numpy as np
import jax
import jax.numpy as jnp
from jax.experimental import pallas as pl
from jax.experimental.pallas import tpu as pltpu


def _round_up(x, m):
    return ((x + m - 1) // m) * m


def _cdiv(a, b):
    return (a + b - 1) // b


# ----------------------------------------------------------------------------
# Deterministic parameter construction (mirrors nnAudio __init__ shapes)
# ----------------------------------------------------------------------------
def create_fourier_kernels(n_fft, win_length, sr):
    """Returns wsin, wcos with shape (freq_bins, n_fft), freq_bins = n_fft//2 + 1."""
    freq_bins = n_fft // 2 + 1
    n = np.arange(n_fft, dtype=np.float64)
    # periodic Hann window (scipy.signal.get_window('hann', win_length, fftbins=True))
    win = 0.5 - 0.5 * np.cos(
        2.0 * np.pi * np.arange(win_length, dtype=np.float64) / win_length)
    if win_length < n_fft:                       # pad_center, like nnAudio
        lpad = (n_fft - win_length) // 2
        window = np.zeros(n_fft, dtype=np.float64)
        window[lpad:lpad + win_length] = win
    else:
        # TODO(synk): nnAudio errors when win_length > n_fft; we truncate instead.
        window = win[:n_fft]
    k = np.arange(freq_bins, dtype=np.float64)[:, None]
    wsin = np.sin(2.0 * np.pi * k * n[None, :] / n_fft) * window[None, :]
    wcos = np.cos(2.0 * np.pi * k * n[None, :] / n_fft) * window[None, :]
    return wsin.astype(np.float32), wcos.astype(np.float32)


def get_gammatone(sr, n_fft, n_bins, fmin, fmax):
    """Deterministic gammatone filterbank, shape (n_bins, n_fft//2 + 1)."""
    # TODO(synk): deterministic ERB-spaced 4th-order gammatone magnitude
    # approximation, not nnAudio's exact Slaney fft2gammatonemx coefficients.
    if fmax is None:
        fmax = sr / 2.0
    ear_q, min_bw = 9.26449, 24.7

    def hz_to_erb(f):
        return 21.4 * np.log10(1.0 + 0.00437 * f)

    def erb_to_hz(e):
        return (10.0 ** (e / 21.4) - 1.0) / 0.00437

    erbs = np.linspace(hz_to_erb(fmin), hz_to_erb(fmax), n_bins)
    cfs = erb_to_hz(erbs)
    bws = 1.019 * (cfs / ear_q + min_bw)
    freqs = np.linspace(0.0, sr / 2.0, n_fft // 2 + 1)
    resp = (1.0 + ((freqs[None, :] - cfs[:, None]) / bws[:, None]) ** 2) ** (-2.0)
    resp = resp / np.maximum(resp.sum(axis=1, keepdims=True), 1e-12)   # norm=1
    return resp.astype(np.float32)


# ----------------------------------------------------------------------------
# Pallas kernel: per (batch, time-tile) STFT-power + gammatone projection
# ----------------------------------------------------------------------------
def _gammatonegram_kernel(power, f_pad, r, main_ref, halo_ref, wsc_ref,
                          gamma_ref, o_ref, *scratch):
    # main_ref : (hop, tT)          hop-major audio, lane axis = time (hops)
    # halo_ref : (hop, 128)         next 128 hop columns (frame-overlap halo)
    # wsc_ref  : (r, 2*f_pad, hop)  prepacked sin/cos STFT weights (zero-padded)
    # gamma_ref: (n_bins_pad, f_pad)
    # o_ref    : (n_bins_pad, tT)
    # scratch  : [(hop, tT + 128)]  slab buffer, present only when r > 1
    tT = o_ref.shape[-1]
    if r > 1:
        slab = scratch[0]
        slab[:, :tT] = main_ref[...]
        slab[:, tT:] = halo_ref[...]
        res = jnp.dot(wsc_ref[0], slab[:, :tT],
                      preferred_element_type=jnp.float32)
        for q in range(1, r):
            # shifted frame columns [q, q + tT) of the slab (q < 128 <= halo)
            res = res + jnp.dot(wsc_ref[q], slab[:, q:q + tT],
                                preferred_element_type=jnp.float32)
    else:
        res = jnp.dot(wsc_ref[0], main_ref[...],
                      preferred_element_type=jnp.float32)          # (2*f_pad, tT)

    s = res[:f_pad, :]
    c = res[f_pad:, :]
    p2 = s * s + c * c                                             # |X|^2
    if power == 2.0:          # default: no sqrt, no pow (EUP-free)
        spec = p2
    elif power == 1.0:        # magnitude spectrogram
        spec = jnp.sqrt(p2)
    else:                     # generic exponent, eps guards pow at exact zeros
        spec = (p2 + 1e-30) ** (0.5 * power)

    # TODO(synk): zero-extending spec to K=128 would avoid a partial-lane
    # contraction on this matmul; skipped because the kernel is HBM-bound.
    o_ref[...] = jnp.dot(gamma_ref[...], spec,
                         preferred_element_type=jnp.float32)       # (n_bins_pad, tT)


@functools.partial(jax.jit, static_argnames=(
    "n_fft", "stride", "center", "pad_mode", "power", "n_bins", "f_pad",
    "hop_k", "r", "fast_path", "single_buffer_weights"))
def _gammatonegram_forward(x, wsc_r, gamma_pad, *, n_fft, stride, center,
                           pad_mode, power, n_bins, f_pad, hop_k, r,
                           fast_path, single_buffer_weights):
    # broadcast_dim: accept (L,), (B, L), (B, 1, L)
    if x.ndim == 1:
        x = x[None, :]
    elif x.ndim == 3:
        x = x[:, 0, :]
    x = x.astype(jnp.float32)

    if center:
        pad = n_fft // 2
        mode = "constant" if pad_mode == "constant" else "reflect"
        x = jnp.pad(x, ((0, 0), (pad, pad)), mode=mode)

    B, L = x.shape
    T = (L - n_fft) // stride + 1
    n_bins_pad = gamma_pad.shape[0]
    in_dtype = wsc_r.dtype
    in_bytes = np.dtype(in_dtype).itemsize
    HALO = 128

    # ---- time tiling: lane-dense tiles sized against a v7x-safe VMEM budget --
    T128 = _round_up(T, 128)
    n_weight_bufs = 1 if single_buffer_weights else 2
    fixed_bytes = (n_weight_bufs * (wsc_r.size * in_bytes + gamma_pad.size * 4)
                   + 2 * hop_k * HALO * in_bytes              # halo double buffer
                   + (2 << 20))                               # compiler slack
    per_col_bytes = (2 * hop_k * in_bytes                     # main double buffer
                     + 2 * n_bins_pad * 4                     # out double buffer
                     + 2 * hop_k * in_bytes                   # slab scratch + copy
                     + (2 * f_pad + f_pad) * 4)               # res + spec values
    budget = 44 << 20                                         # fits v7x 64 MiB VMEM
    tT_cap = max(128, min(2048,
                          ((budget - fixed_bytes) // per_col_bytes) // 128 * 128))

    # >= 2 time tiles when B == 1 so both v7x TensorCores get work.
    min_tiles = 2 if (B == 1 and T128 >= 256) else 1
    n_tiles = max(_cdiv(T128, tT_cap), min_tiles)
    tT = _round_up(_cdiv(T128, n_tiles), 128)   # minimal-waste tile size
    grid_t = _cdiv(T128, tT)
    T_pad = grid_t * tT
    H_pad = T_pad + HALO            # hop-major columns incl. the last tile's halo

    # ---- build the kernel's audio operand ------------------------------------
    if fast_path:
        # hop-major view of the raw audio: hm[b, i, h] = x[b, h*stride + i]
        # (no materialized n_fft/hop-redundant frame matrix, no XLA gather)
        L_need = H_pad * stride
        if L_need > L:
            x = jnp.pad(x, ((0, 0), (0, L_need - L)))
        else:
            x = x[:, :L_need]
        hm = x.reshape(B, H_pad, stride).transpose(0, 2, 1)    # (B, hop, H_pad)
    else:
        # TODO(synk): slow fallback (hop does not divide n_fft, hop > n_fft, or
        # n_fft/hop > 128): materialize the redundant frame matrix (r == 1).
        L_need = (H_pad - 1) * stride + n_fft
        if L_need > L:
            x = jnp.pad(x, ((0, 0), (0, L_need - L)))
        idx = jnp.arange(n_fft)[:, None] + stride * jnp.arange(H_pad)[None, :]
        hm = x[:, idx]                                         # (B, n_fft, H_pad)
    hm = hm.astype(in_dtype)

    # ---- scheduler hints ------------------------------------------------------
    flops = 2 * B * T_pad * (2 * f_pad * r * hop_k + n_bins_pad * f_pad)
    transcendentals = 0 if power == 2.0 else B * T_pad * f_pad
    bytes_accessed = (in_bytes * B * hop_k * (H_pad + grid_t * HALO)
                      + in_bytes * wsc_r.size + 4 * gamma_pad.size
                      + 4 * B * n_bins_pad * T_pad)
    vmem_bytes = int(min(64 << 20,
                         max(8 << 20,
                             fixed_bytes + per_col_bytes * tT + (2 << 20))))

    weight_mode = dict(pipeline_mode=pl.Buffered(1)) if single_buffer_weights else {}
    scratch_shapes = ([pltpu.VMEM((hop_k, tT + HALO), in_dtype)] if r > 1 else [])

    out = pl.pallas_call(
        functools.partial(_gammatonegram_kernel, power, f_pad, r),
        out_shape=jax.ShapeDtypeStruct((B, n_bins_pad, T_pad), jnp.float32),
        grid=(B, grid_t),
        in_specs=[
            # main tile: hop-major columns [t*tT, (t+1)*tT)
            pl.BlockSpec((None, hop_k, tT), lambda b, t: (b, 0, t)),
            # 128-column halo: columns [(t+1)*tT, (t+1)*tT + 128)
            pl.BlockSpec((None, hop_k, HALO),
                         lambda b, t: (b, 0, (t + 1) * (tT // HALO))),
            pl.BlockSpec((r, 2 * f_pad, hop_k), lambda b, t: (0, 0, 0),
                         **weight_mode),
            pl.BlockSpec((n_bins_pad, f_pad), lambda b, t: (0, 0),
                         **weight_mode),
        ],
        out_specs=pl.BlockSpec((None, n_bins_pad, tT), lambda b, t: (b, 0, t)),
        scratch_shapes=scratch_shapes,
        compiler_params=pltpu.CompilerParams(
            dimension_semantics=("parallel", "parallel"),
            vmem_limit_bytes=vmem_bytes),
        cost_estimate=pl.CostEstimate(flops=int(flops),
                                      transcendentals=int(transcendentals),
                                      bytes_accessed=int(bytes_accessed)),
    )(hm, hm, wsc_r, gamma_pad)

    # PyTorch returns (num_samples, n_bins, time_steps) -- already in that order.
    return out[:, :n_bins, :T]


class Gammatonegram:
    """JAX/Pallas port of nnAudio's Gammatonegram forward pass (inference)."""

    def __init__(self, sr=44100, n_fft=2048, n_bins=64, win_length=None,
                 hop_length=512, window='hann', center=True, pad_mode='reflect',
                 power=2.0, htk=False, fmin=20.0, fmax=None, norm=1,
                 trainable_bins=False, trainable_STFT=False, verbose=False,
                 stft_dtype=jnp.float32):
        # TODO(synk): only the 'hann' window and the non-trainable path are
        # implemented; htk/norm follow nnAudio defaults implicitly.
        del window, htk, norm, trainable_bins, trainable_STFT, verbose
        self.sr = sr
        self.n_fft = n_fft
        self.n_bins = n_bins
        self.stride = hop_length
        self.center = center
        self.pad_mode = pad_mode
        self.power = float(power)
        self.freq_bins = n_fft // 2 + 1

        win_length = win_length or n_fft
        wsin, wcos = create_fourier_kernels(n_fft, win_length, sr)   # (F, n_fft)
        gamma = get_gammatone(sr, n_fft, n_bins, fmin, fmax)         # (n_bins, F)
        self.wsin, self.wcos, self.gamma = wsin, wcos, gamma         # for reference

        F = self.freq_bins
        self.f_pad = _round_up(F, 8)            # sublane-aligned sin/cos split
        n_bins_pad = _round_up(n_bins, 8)

        # Fast (hop-major) path: hop tiles n_fft exactly and the 128-column
        # halo covers the frame overlap (r - 1 < 128).
        self.fast_path = (0 < hop_length <= n_fft and n_fft % hop_length == 0
                          and n_fft // hop_length <= 128)
        if self.fast_path:
            self.hop_k, self.r = hop_length, n_fft // hop_length
        else:
            self.hop_k, self.r = n_fft, 1

        # Combined zero-padded STFT weight, prepacked per hop phase q:
        #   wsc_r[q, 0:F, i]           = wsin[:, q*hop_k + i]
        #   wsc_r[q, f_pad:f_pad+F, i] = wcos[:, q*hop_k + i]
        wsc = np.zeros((2 * self.f_pad, n_fft), np.float32)
        wsc[:F] = wsin
        wsc[self.f_pad:self.f_pad + F] = wcos
        wsc_r = np.ascontiguousarray(
            wsc.reshape(2 * self.f_pad, self.r, self.hop_k).transpose(1, 0, 2))
        self.wsc_r = jnp.asarray(wsc_r, dtype=stft_dtype)

        gpad = np.zeros((n_bins_pad, self.f_pad), np.float32)
        gpad[:n_bins, :F] = gamma               # padded rows/cols are zeros
        self.gamma_pad = jnp.asarray(gpad)

        # Single-buffer the constant weight blocks when they are big enough to
        # matter for v7x's 64 MiB VMEM (roughly n_fft >= 1024).
        self.single_buffer_weights = wsc_r.nbytes > (4 << 20)

    def __call__(self, x):
        return _gammatonegram_forward(
            x, self.wsc_r, self.gamma_pad,
            n_fft=self.n_fft, stride=self.stride, center=self.center,
            pad_mode=self.pad_mode, power=self.power, n_bins=self.n_bins,
            f_pad=self.f_pad, hop_k=self.hop_k, r=self.r,
            fast_path=self.fast_path,
            single_buffer_weights=self.single_buffer_weights)


# ----------------------------------------------------------------------------
# Pure-JAX reference (mirrors the PyTorch semantics: sqrt(.)**power)
# ----------------------------------------------------------------------------
def _reference(layer, x):
    if x.ndim == 1:
        x = x[None, :]
    elif x.ndim == 3:
        x = x[:, 0, :]
    x = jnp.asarray(x, jnp.float32)
    if layer.center:
        pad = layer.n_fft // 2
        mode = 'constant' if layer.pad_mode == 'constant' else 'reflect'
        x = jnp.pad(x, ((0, 0), (pad, pad)), mode=mode)
    B, L = x.shape
    T = (L - layer.n_fft) // layer.stride + 1
    idx = np.arange(T)[:, None] * layer.stride + np.arange(layer.n_fft)[None, :]
    frames = x[:, idx]                                            # (B, T, n_fft)
    s = jnp.einsum('btn,fn->btf', frames, jnp.asarray(layer.wsin))
    c = jnp.einsum('btn,fn->btf', frames, jnp.asarray(layer.wcos))
    spec = jnp.sqrt(s * s + c * c) ** layer.power                 # (B, T, F)
    out = jnp.einsum('mf,btf->bmt', jnp.asarray(layer.gamma), spec)
    return out                                                    # (B, n_bins, T)


if __name__ == "__main__":
    key = jax.random.PRNGKey(0)
    B, L = 2, 512
    x = jax.random.normal(key, (B, L), dtype=jnp.float32)

    n_fft, hop = 128, 32
    T = (L + 2 * (n_fft // 2) - n_fft) // hop + 1   # center-padded frame count

    for power in (2.0, 1.0):                        # default + magnitude paths
        layer = Gammatonegram(sr=16000, n_fft=n_fft, n_bins=32, hop_length=hop,
                              center=True, pad_mode='reflect', power=power,
                              fmin=20.0, fmax=None)
        out = jax.block_until_ready(layer(x))
        ref = jax.block_until_ready(_reference(layer, x))
        assert out.shape == (B, 32, T), out.shape
        np.testing.assert_allclose(np.asarray(out), np.asarray(ref),
                                   rtol=2e-4, atol=2e-3)

    print("KERNEL_OK")
</pallas_src>

<mosaic_0001>
module attributes {stable_mosaic.version = 11 : i64} {
  func.func @_gammatonegram_kernel(%arg0: i32, %arg1: i32, %arg2: memref<1x32x128xf32, #tpu.memory_space<vmem>>, %arg3: memref<1x32x128xf32, #tpu.memory_space<vmem>>, %arg4: memref<4x144x32xf32, #tpu.memory_space<vmem>>, %arg5: memref<32x72xf32, #tpu.memory_space<vmem>>, %arg6: memref<1x32x128xf32, #tpu.memory_space<vmem>>, %arg7: memref<32x256xf32, #tpu.memory_space<vmem>>) attributes {dimension_semantics = [#tpu.dimension_semantics<parallel>, #tpu.dimension_semantics<parallel>], iteration_bounds = array<i64: 2, 1>, scalar_prefetch = 0 : i64, scratch_operands = 1 : i64, tpu.core_type = #tpu.core_type<tc>, window_params = [{transform_indices = @transform_0, window_bounds = array<i64: 1, 32, 128>}, {transform_indices = @transform_1, window_bounds = array<i64: 1, 32, 128>}, {pipeline_mode = #tpu.pipeline_mode<synchronous>, transform_indices = @transform_2, window_bounds = array<i64: 4, 144, 32>}, {pipeline_mode = #tpu.pipeline_mode<synchronous>, transform_indices = @transform_3, window_bounds = array<i64: 32, 72>}, {transform_indices = @transform_4, window_bounds = array<i64: 1, 32, 128>}]} {
    %c0 = arith.constant 0 : index
    %c0_0 = arith.constant 0 : index
    %c0_1 = arith.constant 0 : index
    %0 = vector.load %arg2[%c0, %c0_0, %c0_1] : memref<1x32x128xf32, #tpu.memory_space<vmem>>, vector<1x32x128xf32>
    %1 = vector.shape_cast %0 : vector<1x32x128xf32> to vector<32x128xf32>
    %c0_2 = arith.constant 0 : index
    %c0_3 = arith.constant 0 : index
    %2 = vector.load %arg7[%c0_2, %c0_3] : memref<32x256xf32, #tpu.memory_space<vmem>>, vector<32x128xf32>
    tpu.vector_store %arg7[%c0_2, %c0_3], %1 {strides = array<i32>} : memref<32x256xf32, #tpu.memory_space<vmem>>, vector<32x128xf32>,
    %c0_4 = arith.constant 0 : index
    %c0_5 = arith.constant 0 : index
    %c0_6 = arith.constant 0 : index
    %3 = vector.load %arg3[%c0_4, %c0_5, %c0_6] : memref<1x32x128xf32, #tpu.memory_space<vmem>>, vector<1x32x128xf32>
    %4 = vector.shape_cast %3 : vector<1x32x128xf32> to vector<32x128xf32>
    %c0_7 = arith.constant 0 : index
    %c128 = arith.constant 128 : index
    %5 = vector.load %arg7[%c0_7, %c128] : memref<32x256xf32, #tpu.memory_space<vmem>>, vector<32x128xf32>
    tpu.vector_store %arg7[%c0_7, %c128], %4 {strides = array<i32>} : memref<32x256xf32, #tpu.memory_space<vmem>>, vector<32x128xf32>,
    %c0_8 = arith.constant 0 : index
    %c0_9 = arith.constant 0 : index
    %c0_10 = arith.constant 0 : index
    %6 = vector.load %arg4[%c0_8, %c0_9, %c0_10] : memref<4x144x32xf32, #tpu.memory_space<vmem>>, vector<1x144x32xf32>
    %7 = vector.shape_cast %6 : vector<1x144x32xf32> to vector<144x32xf32>
    %c0_11 = arith.constant 0 : index
    %c0_12 = arith.constant 0 : index
    %8 = vector.load %arg7[%c0_11, %c0_12] : memref<32x256xf32, #tpu.memory_space<vmem>>, vector<32x128xf32>
    %cst = arith.constant dense<0.000000e+00> : vector<144x128xf32>
    %9 = tpu.matmul %7, %8, %cst {dimension_numbers = #tpu.dot_dimension_numbers<[1], [0], [0], [1], [0, 0, 1, 1], [], []>} : vector<144x32xf32>, vector<32x128xf32>, vector<144x128xf32> -> vector<144x128xf32>
    %c1 = arith.constant 1 : index
    %c0_13 = arith.constant 0 : index
    %c0_14 = arith.constant 0 : index
    %10 = vector.load %arg4[%c1, %c0_13, %c0_14] : memref<4x144x32xf32, #tpu.memory_space<vmem>>, vector<1x144x32xf32>
    %11 = vector.shape_cast %10 : vector<1x144x32xf32> to vector<144x32xf32>
    %c0_15 = arith.constant 0 : index
    %c1_16 = arith.constant 1 : index
    %12 = vector.load %arg7[%c0_15, %c1_16] : memref<32x256xf32, #tpu.memory_space<vmem>>, vector<32x128xf32>
    %cst_17 = arith.constant dense<0.000000e+00> : vector<144x128xf32>
    %13 = tpu.matmul %11, %12, %cst_17 {dimension_numbers = #tpu.dot_dimension_numbers<[1], [0], [0], [1], [0, 0, 1, 1], [], []>} : vector<144x32xf32>, vector<32x128xf32>, vector<144x128xf32> -> vector<144x128xf32>
    %14 = arith.addf %9, %13 : vector<144x128xf32>
    %c2 = arith.constant 2 : index
    %c0_18 = arith.constant 0 : index
    %c0_19 = arith.constant 0 : index
    %15 = vector.load %arg4[%c2, %c0_18, %c0_19] : memref<4x144x32xf32, #tpu.memory_space<vmem>>, vector<1x144x32xf32>
    %16 = vector.shape_cast %15 : vector<1x144x32xf32> to vector<144x32xf32>
    %c0_20 = arith.constant 0 : index
    %c2_21 = arith.constant 2 : index
    %17 = vector.load %arg7[%c0_20, %c2_21] : memref<32x256xf32, #tpu.memory_space<vmem>>, vector<32x128xf32>
    %cst_22 = arith.constant dense<0.000000e+00> : vector<144x128xf32>
    %18 = tpu.matmul %16, %17, %cst_22 {dimension_numbers = #tpu.dot_dimension_numbers<[1], [0], [0], [1], [0, 0, 1, 1], [], []>} : vector<144x32xf32>, vector<32x128xf32>, vector<144x128xf32> -> vector<144x128xf32>
    %19 = arith.addf %14, %18 : vector<144x128xf32>
    %c3 = arith.constant 3 : index
    %c0_23 = arith.constant 0 : index
    %c0_24 = arith.constant 0 : index
    %20 = vector.load %arg4[%c3, %c0_23, %c0_24] : memref<4x144x32xf32, #tpu.memory_space<vmem>>, vector<1x144x32xf32>
    %21 = vector.shape_cast %20 : vector<1x144x32xf32> to vector<144x32xf32>
    %c0_25 = arith.constant 0 : index
    %c3_26 = arith.constant 3 : index
    %22 = vector.load %arg7[%c0_25, %c3_26] : memref<32x256xf32, #tpu.memory_space<vmem>>, vector<32x128xf32>
    %cst_27 = arith.constant dense<0.000000e+00> : vector<144x128xf32>
    %23 = tpu.matmul %21, %22, %cst_27 {dimension_numbers = #tpu.dot_dimension_numbers<[1], [0], [0], [1], [0, 0, 1, 1], [], []>} : vector<144x32xf32>, vector<32x128xf32>, vector<144x128xf32> -> vector<144x128xf32>
    %24 = arith.addf %19, %23 : vector<144x128xf32>
    %25 = vector.extract_strided_slice %24 {offsets = [0, 0], sizes = [72, 128], strides = [1, 1]} : vector<144x128xf32> to vector<72x128xf32>
    %26 = vector.extract_strided_slice %24 {offsets = [72, 0], sizes = [72, 128], strides = [1, 1]} : vector<144x128xf32> to vector<72x128xf32>
    %27 = arith.mulf %25, %25 : vector<72x128xf32>
    %28 = arith.mulf %26, %26 : vector<72x128xf32>
    %29 = arith.addf %27, %28 : vector<72x128xf32>
    %c0_28 = arith.constant 0 : index
    %c0_29 = arith.constant 0 : index
    %30 = vector.load %arg5[%c0_28, %c0_29] : memref<32x72xf32, #tpu.memory_space<vmem>>, vector<32x72xf32>
    %cst_30 = arith.constant dense<0.000000e+00> : vector<32x128xf32>
    %31 = tpu.matmul %30, %29, %cst_30 {dimension_numbers = #tpu.dot_dimension_numbers<[1], [0], [0], [1], [0, 0, 1, 1], [], []>} : vector<32x72xf32>, vector<72x128xf32>, vector<32x128xf32> -> vector<32x128xf32>
    %c0_31 = arith.constant 0 : index
    %c0_32 = arith.constant 0 : index
    %c0_33 = arith.constant 0 : index
    %32 = vector.load %arg6[%c0_31, %c0_32, %c0_33] : memref<1x32x128xf32, #tpu.memory_space<vmem>>, vector<1x32x128xf32>
    %33 = vector.shape_cast %32 : vector<1x32x128xf32> to vector<32x128xf32>
    %34 = vector.shape_cast %31 : vector<32x128xf32> to vector<1x32x128xf32>
    tpu.vector_store %arg6[%c0_31, %c0_32, %c0_33], %34 {strides = array<i32>} : memref<1x32x128xf32, #tpu.memory_space<vmem>>, vector<1x32x128xf32>,
    return
  }
  func.func @transform_0(%arg0: i32, %arg1: i32) -> (i32, i32, i32) {
    %c0_i32 = arith.constant 0 : i32
    %c0_i32_0 = arith.constant 0 : i32
    return %arg0, %c0_i32, %arg1 : i32, i32, i32
  }
  func.func @transform_1(%arg0: i32, %arg1: i32) -> (i32, i32, i32) {
    %c1_i32 = arith.constant 1 : i32
    %0 = arith.addi %arg1, %c1_i32 : i32
    %c1_i32_0 = arith.constant 1 : i32
    %1 = arith.muli %0, %c1_i32_0 : i32
    %c0_i32 = arith.constant 0 : i32
    %c0_i32_1 = arith.constant 0 : i32
    return %arg0, %c0_i32, %1 : i32, i32, i32
  }
  func.func @transform_2(%arg0: i32, %arg1: i32) -> (i32, i32, i32) {
    %c0_i32 = arith.constant 0 : i32
    %c0_i32_0 = arith.constant 0 : i32
    %c0_i32_1 = arith.constant 0 : i32
    %c0_i32_2 = arith.constant 0 : i32
    return %c0_i32, %c0_i32_0, %c0_i32_1 : i32, i32, i32
  }
  func.func @transform_3(%arg0: i32, %arg1: i32) -> (i32, i32) {
    %c0_i32 = arith.constant 0 : i32
    %c0_i32_0 = arith.constant 0 : i32
    %c0_i32_1 = arith.constant 0 : i32
    return %c0_i32, %c0_i32_0 : i32, i32
  }
  func.func @transform_4(%arg0: i32, %arg1: i32) -> (i32, i32, i32) {
    %c0_i32 = arith.constant 0 : i32
    %c0_i32_0 = arith.constant 0 : i32
    return %arg0, %c0_i32, %arg1 : i32, i32, i32
  }
}

</mosaic_0001>

<llo_original>
// kernel: _gammatonegram_forward.1
$region0: #{_gammatonegram_forward.1}
  #allocation0 [shape = 'u32[]', space=smem, size = 0x4, offset = 0x4, fixed_abs, tag = 'smem constant byte address 0x4 - core index']
  #allocation1 [shape = 'u32[144,128]{1,0:T(1,128)}', space=vmem, size = 0x12000, scoped, tag = 'internal scratch']
  #allocation2 [shape = 'f32[32,256]{1,0:T(8,128)}', space=vmem, size = 0x8000, scoped, tag = 'scratch operand']
  %s0 = inlined_call_operand.vmem [shape: f32[2,32,256], index: 0, kind: input, shape index: {}, may-alias: {0,1}]
  %s1 = inlined_call_operand.vmem [shape: f32[2,32,256], index: 1, kind: input, shape index: {}, may-alias: {0,1}]
  %s2 = inlined_call_operand.vmem [shape: f32[4,144,32], index: 2, kind: input, shape index: {}]
  %s3 = inlined_call_operand.vmem [shape: f32[32,72], index: 3, kind: input, shape index: {}]
  %s4 = inlined_call_operand.vmem [shape: f32[2,32,128], index: 4, kind: output, shape index: {}]
  %s5 = sld [smem:[#allocation0]]
  $region125: #{_gammatonegram_forward.1} parent=0
    _
  %s7 = ssub.s32 1, %s5
  %s8 = scalar_select 0, %s7, %s5
  $region1: #{_gammatonegram_forward.1} parent=0
    #allocation3 [shape = 'u8[32768]{0}', space=vmem, size = 0x8000, scoped, tag = 'input window, operand 0']
    #allocation4 [shape = 'u8[32768]{0}', space=vmem, size = 0x8000, scoped, tag = 'input window, operand 1']
    loop: start=0, step=1, limit=4
    $region2: #{_gammatonegram_forward.1} parent=1 // loop_pre_header
      _
    $region3: #{_gammatonegram_forward.1} parent=1 // loop_header
      %s10 = sphi 0, %s14
      %p11 = scmp.ge.s32.totalorder %s10, 4
      %s17 = sphi 0, %s29
      %s18 = sphi 0, %s25
      %s19 = sphi 0, %s17
      %s20 = sphi 0, %s18
      %s21 = sphi 0, %s19
      %s22 = sphi 0, %s20
      %s34 = sphi 0, %s36
      %s37 = sphi 0, %s34
      %s38 = sphi 0, %s37
      %s54 = sphi 0, %s38
      %s64 = sphi 0, %s66
      %s67 = sphi 0, %s64
      %s68 = sphi 0, %s67
      %s84 = sphi 0, %s68
      %s88 = sphi 0, %s88
      %s90 = sphi 0, %s88
      %s91 = sphi 0, %s90
      %s105 = sphi 0, %s91
      %s109 = sphi 0, %s109
      %s111 = sphi 0, %s109
      %s112 = sphi 0, %s111
      %s126 = sphi 0, %s112
      %s134 = sphi 0, %s136
      %s137 = sphi 0, %s134
      %s138 = sphi 0, %s137
      %s154 = sphi 0, %s138
    $region4: #{_gammatonegram_forward.1} parent=1 // loop_header_branch
      %13 = sbr.rel (%p11) target = $region8
    $region5: #{_gammatonegram_forward.1} parent=1 // loop_body
      %s15 = ssub.s32 %s10, 1
      %s16 = ssub.s32 %s10, 2
      %s23 = sadd.s32 1, %s18
      %p24 = scmp.ge.s32.totalorder %s23, 1
      %s25 = scalar_select %p24, 0, %s23
      %s26 = sadd.s32 1, %s17
      %s27 = scalar_select %p24, %s26, %s17
      %p28 = scmp.ge.s32.totalorder %s27, 2
      %s29 = scalar_select %p28, 0, %s27
      %s30 = ssub.s32 %s17, %s29
      %s31 = ssub.s32 %s18, %s25
      %s32 = sor.u32 %s30, %s31
      %p33 = scmp.eq.s32.totalorder %s32, 0
      %s35 = sadd.s32 %s34, 1
      %s36 = scalar_select %p33, %s34, %s35
      %p39 = pneg %p33
      %p40 = scmp.eq.s32.totalorder %s10, 1
      %p41 = por %p39, %p40
      %p42 = scmp.ne.s32.totalorder %s34, %s37
      %p43 = scmp.eq.s32.totalorder %s10, 0
      %p44 = por %p42, %p43
      %p45 = scmp.ne.s32.totalorder %s34, %s37
      %p46 = scmp.eq.s32.totalorder %s15, 1
      %p47 = por %p45, %p46
      %p48 = scmp.ne.s32.totalorder %s37, %s38
      %p49 = scmp.eq.s32.totalorder %s15, 0
      %p50 = por %p48, %p49
      %p51 = scmp.ne.s32.totalorder %s37, %s38
      %p52 = scmp.eq.s32.totalorder %s16, 1
      %p53 = por %p51, %p52
      %p55 = scmp.ne.s32.totalorder %s38, %s54
      %p56 = scmp.eq.s32.totalorder %s16, 0
      %p57 = por %p55, %p56
      %s58 = sadd.s32 %s18, 1
      %s59 = sadd.s32 %s25, 1
      %s60 = ssub.s32 %s17, %s29
      %s61 = ssub.s32 %s58, %s59
      %s62 = sor.u32 %s60, %s61
      %p63 = scmp.eq.s32.totalorder %s62, 0
      %s65 = sadd.s32 %s64, 1
      %s66 = scalar_select %p63, %s64, %s65
      %p69 = pneg %p63
      %p70 = scmp.eq.s32.totalorder %s10, 1
      %p71 = por %p69, %p70
      %p72 = scmp.ne.s32.totalorder %s64, %s67
      %p73 = scmp.eq.s32.totalorder %s10, 0
      %p74 = por %p72, %p73
      %p75 = scmp.ne.s32.totalorder %s64, %s67
      %p76 = scmp.eq.s32.totalorder %s15, 1
      %p77 = por %p75, %p76
      %p78 = scmp.ne.s32.totalorder %s67, %s68
      %p79 = scmp.eq.s32.totalorder %s15, 0
      %p80 = por %p78, %p79
      %p81 = scmp.ne.s32.totalorder %s67, %s68
      %p82 = scmp.eq.s32.totalorder %s16, 1
      %p83 = por %p81, %p82
      %p85 = scmp.ne.s32.totalorder %s68, %s84
      %p86 = scmp.eq.s32.totalorder %s16, 0
      %p87 = por %p85, %p86
      %s89 = sadd.s32 %s88, 1
      %p92 = scmp.eq.s32.totalorder %s10, 1
      %p93 = scmp.ne.s32.totalorder %s88, %s90
      %p94 = scmp.eq.s32.totalorder %s10, 0
      %p95 = por %p93, %p94
      %p96 = scmp.ne.s32.totalorder %s88, %s90
      %p97 = scmp.eq.s32.totalorder %s15, 1
      %p98 = por %p96, %p97
      %p99 = scmp.ne.s32.totalorder %s90, %s91
      %p100 = scmp.eq.s32.totalorder %s15, 0
      %p101 = por %p99, %p100
      %p102 = scmp.ne.s32.totalorder %s90, %s91
      %p103 = scmp.eq.s32.totalorder %s16, 1
      %p104 = por %p102, %p103
      %p106 = scmp.ne.s32.totalorder %s91, %s105
      %p107 = scmp.eq.s32.totalorder %s16, 0
      %p108 = por %p106, %p107
      %s110 = sadd.s32 %s109, 1
      %p113 = scmp.eq.s32.totalorder %s10, 1
      %p114 = scmp.ne.s32.totalorder %s109, %s111
      %p115 = scmp.eq.s32.totalorder %s10, 0
      %p116 = por %p114, %p115
      %p117 = scmp.ne.s32.totalorder %s109, %s111
      %p118 = scmp.eq.s32.totalorder %s15, 1
      %p119 = por %p117, %p118
      %p120 = scmp.ne.s32.totalorder %s111, %s112
      %p121 = scmp.eq.s32.totalorder %s15, 0
      %p122 = por %p120, %p121
      %p123 = scmp.ne.s32.totalorder %s111, %s112
      %p124 = scmp.eq.s32.totalorder %s16, 1
      %p125 = por %p123, %p124
      %p127 = scmp.ne.s32.totalorder %s112, %s126
      %p128 = scmp.eq.s32.totalorder %s16, 0
      %p129 = por %p127, %p128
      %s130 = ssub.s32 %s17, %s29
      %s131 = ssub.s32 %s18, %s25
      %s132 = sor.u32 %s130, %s131
      %p133 = scmp.eq.s32.totalorder %s132, 0
      %s135 = sadd.s32 %s134, 1
      %s136 = scalar_select %p133, %s134, %s135
      %p139 = pneg %p133
      %p140 = scmp.eq.s32.totalorder %s10, 1
      %p141 = por %p139, %p140
      %p142 = scmp.ne.s32.totalorder %s134, %s137
      %p143 = scmp.eq.s32.totalorder %s10, 0
      %p144 = por %p142, %p143
      %p145 = scmp.ne.s32.totalorder %s134, %s137
      %p146 = scmp.eq.s32.totalorder %s15, 1
      %p147 = por %p145, %p146
      %p148 = scmp.ne.s32.totalorder %s137, %s138
      %p149 = scmp.eq.s32.totalorder %s15, 0
      %p150 = por %p148, %p149
      %p151 = scmp.ne.s32.totalorder %s137, %s138
      %p152 = scmp.eq.s32.totalorder %s16, 1
      %p153 = por %p151, %p152
      %p155 = scmp.ne.s32.totalorder %s138, %s154
      %p156 = scmp.eq.s32.totalorder %s16, 0
      %p157 = por %p155, %p156
      %p158 = scmp.le.s32.totalorder 1, %s10
      %p159 = scmp.lt.s32.totalorder %s10, 3
      %p160 = pnand %p158, %p159
      %p161 = pneg %p160
      // Predicated region
      $region9: #{_gammatonegram_forward.1} parent=5 // pred_check
        _
      $region10: #{_gammatonegram_forward.1} parent=5 // pred_check_branch
        %163 = sbr.rel (%p160) target = $region12
      $region11: #{_gammatonegram_forward.1} parent=5 // pred_region
        %s164 = ssub.s32 %s10, 1
        // Predicated region
        $region13: #{_gammatonegram_forward.1} parent=11 // pred_check
          %p165 = pneg %p101
        $region14: #{_gammatonegram_forward.1} parent=11 // pred_check_branch
          %167 = sbr.rel (%p165) target = $region16
        $region15: #{_gammatonegram_forward.1} parent=11 // pred_region
          _
        $region16: #{_gammatonegram_forward.1} parent=11 // pred_fallthru
          _
        // Predicated region
        $region17: #{_gammatonegram_forward.1} parent=11 // pred_check
          %p168 = pneg %p122
        $region18: #{_gammatonegram_forward.1} parent=11 // pred_check_branch
          %170 = sbr.rel (%p168) target = $region20
        $region19: #{_gammatonegram_forward.1} parent=11 // pred_region
          _
        $region20: #{_gammatonegram_forward.1} parent=11 // pred_fallthru
          _
      $region12: #{_gammatonegram_forward.1} parent=5 // pred_fallthru
        _
      %p171 = scmp.lt.s32.totalorder %s10, 2
      // Predicated region
      $region21: #{_gammatonegram_forward.1} parent=5 // pred_check
        %p172 = pneg %p171
      $region22: #{_gammatonegram_forward.1} parent=5 // pred_check_branch
        %174 = sbr.rel (%p172) target = $region24
      $region23: #{_gammatonegram_forward.1} parent=5 // pred_region
        // Predicated region
        $region25: #{_gammatonegram_forward.1} parent=23 // pred_check
          %p175 = pneg %p44
        $region26: #{_gammatonegram_forward.1} parent=23 // pred_check_branch
          %177 = sbr.rel (%p175) target = $region28
        $region27: #{_gammatonegram_forward.1} parent=23 // pred_region
          %s178 = sand.u32 %s34, 1
          %s179 = sand.u32 %s34, 1
          %s180 = smul.addr %s179, 32
          %s181 = scalar_lea.vmem [#allocation3], %s180
          %s182 = smul.addr %s17, 8
          %s183 = sadd.s32 %s18, %s182
          %s184 = smul.addr %s183, 8
          %s185 = scalar_lea.vmem %s0, %s184
          // Predicated region
          $region29: #{_gammatonegram_forward.1} parent=27 // pred_check
            _
          $region30: #{_gammatonegram_forward.1} parent=27 // pred_check_branch
            %187 = sbr.rel (0) target = $region32
          $region31: #{_gammatonegram_forward.1} parent=27 // pred_region
            // Predicated region
            $region33: #{_gammatonegram_forward.1} parent=31 // pred_check
              _
            $region34: #{_gammatonegram_forward.1} parent=31 // pred_check_branch
              %189 = sbr.rel (0) target = $region36
            $region35: #{_gammatonegram_forward.1} parent=31 // pred_region
              // Predicated region
              $region48: #{_gammatonegram_forward.1} parent=35 // pred_check
                _
              $region49: #{_gammatonegram_forward.1} parent=35 // pred_check_branch
                %211 = sbr.rel (0) target = $region51
              $region50: #{_gammatonegram_forward.1} parent=35 // pred_region
                loop: start=0, step=1, limit=1
                $region52: #{_gammatonegram_forward.1} parent=50 // loop_pre_header
                  _
                $region53: #{_gammatonegram_forward.1} parent=50 // loop_header
                  %s213 = sphi 0, %s217
                  %p214 = scmp.ge.s32.totalorder %s213, 1
                  %s218 = sphi %s185, %s185
                  %s219 = sphi %s181, %s181
                $region54: #{_gammatonegram_forward.1} parent=50 // loop_header_branch
                  %216 = sbr.rel (%p214) target = $region58
                $region55: #{_gammatonegram_forward.1} parent=50 // loop_body
                  %v220 = vld [vmem:[%s218] sm:$0xff]
                  %221 = vst [vmem:[%s219] sm:$0xff] %v220
                  %v222 = vld [vmem:[%s218 + $0x10] sm:$0xff]
                  %223 = vst [vmem:[%s219 + $0x8] sm:$0xff] %v222
                  %v224 = vld [vmem:[%s218 + $0x20] sm:$0xff]
                  %225 = vst [vmem:[%s219 + $0x10] sm:$0xff] %v224
                  %v226 = vld [vmem:[%s218 + $0x30] sm:$0xff]
                  %227 = vst [vmem:[%s219 + $0x18] sm:$0xff] %v226
                $region56: #{_gammatonegram_forward.1} parent=50 // loop_footer
                  %s217 = sadd.s32 1, %s213
                $region57: #{_gammatonegram_forward.1} parent=50 // loop_footer_branch
                  %212 = sbr.rel target = $region53
                $region58: #{_gammatonegram_forward.1} parent=50 // loop_exit
                  _
              $region51: #{_gammatonegram_forward.1} parent=35 // pred_fallthru
                _
              // Predicated region
              $region59: #{_gammatonegram_forward.1} parent=35 // pred_check
                _
              $region60: #{_gammatonegram_forward.1} parent=35 // pred_check_branch
                %229 = sbr.rel target = $region62
              $region61: #{_gammatonegram_forward.1} parent=35 // pred_region
                _
              $region62: #{_gammatonegram_forward.1} parent=35 // pred_fallthru
                _
            $region36: #{_gammatonegram_forward.1} parent=31 // pred_fallthru
              _
            // Predicated region
            $region37: #{_gammatonegram_forward.1} parent=31 // pred_check
              _
            $region38: #{_gammatonegram_forward.1} parent=31 // pred_check_branch
              %191 = sbr.rel target = $region40
            $region39: #{_gammatonegram_forward.1} parent=31 // pred_region
              %s193 = ssub.s32 256, 1
              loop: start=0, step=1, limit=1
              $region41: #{_gammatonegram_forward.1} parent=39 // loop_pre_header
                _
              $region42: #{_gammatonegram_forward.1} parent=39 // loop_header
                %s195 = sphi 0, %s199
                %p196 = scmp.ge.s32.totalorder %s195, 1
                %s200 = sphi %s185, %s185
                %s201 = sphi %s181, %s181
              $region43: #{_gammatonegram_forward.1} parent=39 // loop_header_branch
                %198 = sbr.rel (%p196) target = $region47
              $region44: #{_gammatonegram_forward.1} parent=39 // loop_body
                %v202 = vld [vmem:[%s200] sm:%s193]
                %203 = vst [vmem:[%s201] sm:%s193] %v202
                %v204 = vld [vmem:[%s200 + $0x10] sm:%s193]
                %205 = vst [vmem:[%s201 + $0x8] sm:%s193] %v204
                %v206 = vld [vmem:[%s200 + $0x20] sm:%s193]
                %207 = vst [vmem:[%s201 + $0x10] sm:%s193] %v206
                %v208 = vld [vmem:[%s200 + $0x30] sm:%s193]
                %209 = vst [vmem:[%s201 + $0x18] sm:%s193] %v208
              $region45: #{_gammatonegram_forward.1} parent=39 // loop_footer
                %s199 = sadd.s32 1, %s195
              $region46: #{_gammatonegram_forward.1} parent=39 // loop_footer_branch
                %194 = sbr.rel target = $region42
              $region47: #{_gammatonegram_forward.1} parent=39 // loop_exit
                _
            $region40: #{_gammatonegram_forward.1} parent=31 // pred_fallthru
              _
          $region32: #{_gammatonegram_forward.1} parent=27 // pred_fallthru
            _
          %230 = vnop
        $region28: #{_gammatonegram_forward.1} parent=23 // pred_fallthru
          _
        // Predicated region
        $region63: #{_gammatonegram_forward.1} parent=23 // pred_check
          %p231 = pneg %p74
        $region64: #{_gammatonegram_forward.1} parent=23 // pred_check_branch
          %233 = sbr.rel (%p231) target = $region66
        $region65: #{_gammatonegram_forward.1} parent=23 // pred_region
          %s234 = sand.u32 %s64, 1
          %s235 = sand.u32 %s64, 1
          %s236 = smul.addr %s235, 32
          %s237 = scalar_lea.vmem [#allocation4], %s236
          %s238 = sadd.s32 %s18, 1
          %s239 = smul.addr %s17, 8
          %s240 = sadd.s32 %s238, %s239
          %s241 = smul.addr %s240, 8
          %s242 = scalar_lea.vmem %s1, %s241
          // Predicated region
          $region67: #{_gammatonegram_forward.1} parent=65 // pred_check
            _
          $region68: #{_gammatonegram_forward.1} parent=65 // pred_check_branch
            %244 = sbr.rel (0) target = $region70
          $region69: #{_gammatonegram_forward.1} parent=65 // pred_region
            // Predicated region
            $region71: #{_gammatonegram_forward.1} parent=69 // pred_check
              _
            $region72: #{_gammatonegram_forward.1} parent=69 // pred_check_branch
              %246 = sbr.rel (0) target = $region74
            $region73: #{_gammatonegram_forward.1} parent=69 // pred_region
              // Predicated region
              $region86: #{_gammatonegram_forward.1} parent=73 // pred_check
                _
              $region87: #{_gammatonegram_forward.1} parent=73 // pred_check_branch
                %268 = sbr.rel (0) target = $region89
              $region88: #{_gammatonegram_forward.1} parent=73 // pred_region
                loop: start=0, step=1, limit=1
                $region90: #{_gammatonegram_forward.1} parent=88 // loop_pre_header
                  _
                $region91: #{_gammatonegram_forward.1} parent=88 // loop_header
                  %s270 = sphi 0, %s274
                  %p271 = scmp.ge.s32.totalorder %s270, 1
                  %s275 = sphi %s242, %s242
                  %s276 = sphi %s237, %s237
                $region92: #{_gammatonegram_forward.1} parent=88 // loop_header_branch
                  %273 = sbr.rel (%p271) target = $region96
                $region93: #{_gammatonegram_forward.1} parent=88 // loop_body
                  %v277 = vld [vmem:[%s275] sm:$0xff]
                  %278 = vst [vmem:[%s276] sm:$0xff] %v277
                  %v279 = vld [vmem:[%s275 + $0x10] sm:$0xff]
                  %280 = vst [vmem:[%s276 + $0x8] sm:$0xff] %v279
                  %v281 = vld [vmem:[%s275 + $0x20] sm:$0xff]
                  %282 = vst [vmem:[%s276 + $0x10] sm:$0xff] %v281
                  %v283 = vld [vmem:[%s275 + $0x30] sm:$0xff]
                  %284 = vst [vmem:[%s276 + $0x18] sm:$0xff] %v283
                $region94: #{_gammatonegram_forward.1} parent=88 // loop_footer
                  %s274 = sadd.s32 1, %s270
                $region95: #{_gammatonegram_forward.1} parent=88 // loop_footer_branch
                  %269 = sbr.rel target = $region91
                $region96: #{_gammatonegram_forward.1} parent=88 // loop_exit
                  _
              $region89: #{_gammatonegram_forward.1} parent=73 // pred_fallthru
                _
              // Predicated region
              $region97: #{_gammatonegram_forward.1} parent=73 // pred_check
                _
              $region98: #{_gammatonegram_forward.1} parent=73 // pred_check_branch
                %286 = sbr.rel target = $region100
              $region99: #{_gammatonegram_forward.1} parent=73 // pred_region
                _
              $region100: #{_gammatonegram_forward.1} parent=73 // pred_fallthru
                _
            $region74: #{_gammatonegram_forward.1} parent=69 // pred_fallthru
              _
            // Predicated region
            $region75: #{_gammatonegram_forward.1} parent=69 // pred_check
              _
            $region76: #{_gammatonegram_forward.1} parent=69 // pred_check_branch
              %248 = sbr.rel target = $region78
            $region77: #{_gammatonegram_forward.1} parent=69 // pred_region
              %s250 = ssub.s32 256, 1
              loop: start=0, step=1, limit=1
              $region79: #{_gammatonegram_forward.1} parent=77 // loop_pre_header
                _
              $region80: #{_gammatonegram_forward.1} parent=77 // loop_header
                %s252 = sphi 0, %s256
                %p253 = scmp.ge.s32.totalorder %s252, 1
                %s257 = sphi %s242, %s242
                %s258 = sphi %s237, %s237
              $region81: #{_gammatonegram_forward.1} parent=77 // loop_header_branch
                %255 = sbr.rel (%p253) target = $region85
              $region82: #{_gammatonegram_forward.1} parent=77 // loop_body
                %v259 = vld [vmem:[%s257] sm:%s250]
                %260 = vst [vmem:[%s258] sm:%s250] %v259
                %v261 = vld [vmem:[%s257 + $0x10] sm:%s250]
                %262 = vst [vmem:[%s258 + $0x8] sm:%s250] %v261
                %v263 = vld [vmem:[%s257 + $0x20] sm:%s250]
                %264 = vst [vmem:[%s258 + $0x10] sm:%s250] %v263
                %v265 = vld [vmem:[%s257 + $0x30] sm:%s250]
                %266 = vst [vmem:[%s258 + $0x18] sm:%s250] %v265
              $region83: #{_gammatonegram_forward.1} parent=77 // loop_footer
                %s256 = sadd.s32 1, %s252
              $region84: #{_gammatonegram_forward.1} parent=77 // loop_footer_branch
                %251 = sbr.rel target = $region80
              $region85: #{_gammatonegram_forward.1} parent=77 // loop_exit
                _
            $region78: #{_gammatonegram_forward.1} parent=69 // pred_fallthru
              _
          $region70: #{_gammatonegram_forward.1} parent=65 // pred_fallthru
            _
          %287 = vnop
        $region66: #{_gammatonegram_forward.1} parent=23 // pred_fallthru
          _
      $region24: #{_gammatonegram_forward.1} parent=5 // pred_fallthru
        _
      %p288 = scmp.le.s32.totalorder 1, %s10
      %p289 = scmp.lt.s32.totalorder %s10, 3
      %p290 = pnand %p288, %p289
      %p291 = pneg %p290
      // Predicated region
      $region101: #{_gammatonegram_forward.1} parent=5 // pred_check
        _
      $region102: #{_gammatonegram_forward.1} parent=5 // pred_check_branch
        %293 = sbr.rel (%p290) target = $region104
      $region103: #{_gammatonegram_forward.1} parent=5 // pred_region
        %s294 = ssub.s32 %s10, 1
        %s295 = sand.u32 %s37, 1
        %s296 = sand.u32 %s37, 1
        %s297 = smul.addr %s296, 32
        %s298 = scalar_lea.vmem [#allocation3], %s297
        // Predicated region
        $region105: #{_gammatonegram_forward.1} parent=103 // pred_check
          %p299 = pneg %p50
        $region106: #{_gammatonegram_forward.1} parent=103 // pred_check_branch
          %301 = sbr.rel (%p299) target = $region108
        $region107: #{_gammatonegram_forward.1} parent=103 // pred_region
          _
        $region108: #{_gammatonegram_forward.1} parent=103 // pred_fallthru
          _
        %s302 = sand.u32 %s67, 1
        %s303 = sand.u32 %s67, 1
        %s304 = smul.addr %s303, 32
        %s305 = scalar_lea.vmem [#allocation4], %s304
        // Predicated region
        $region109: #{_gammatonegram_forward.1} parent=103 // pred_check
          %p306 = pneg %p80
        $region110: #{_gammatonegram_forward.1} parent=103 // pred_check_branch
          %308 = sbr.rel (%p306) target = $region112
        $region111: #{_gammatonegram_forward.1} parent=103 // pred_region
          _
        $region112: #{_gammatonegram_forward.1} parent=103 // pred_fallthru
          _
        %s309 = sand.u32 %s37, 1
        %s310 = sand.u32 %s37, 1
        %s311 = smul.addr %s310, 32
        %s312 = scalar_lea.vmem [#allocation3], %s311
        %p313 = pneg %p50
        %p314 = pneg %p47
        %s315 = sand.u32 %s67, 1
        %s316 = sand.u32 %s67, 1
        %s317 = smul.addr %s316, 32
        %s318 = scalar_lea.vmem [#allocation4], %s317
        %p319 = pneg %p80
        %p320 = pneg %p77
        %p321 = pneg %p101
        %p322 = pneg %p98
        %p323 = pneg %p122
        %p324 = pneg %p119
        %p325 = pneg %p150
        %p326 = pneg %p147
        %p327 = scmp.lt.s32.totalorder %s19, 1
        %s328 = scalar_select %p327, %s19, 1
        %p329 = scmp.lt.s32.totalorder %s20, 0
        %s330 = scalar_select %p329, %s20, 0
        %s331 = smul.addr %s328, 4
        %s332 = sadd.s32 %s330, %s331
        %s333 = smul.addr %s332, 8
        %s334 = scalar_lea.vmem %s4, %s333
        %s335 = sadd.s32 %s20, 1
        %p336 = scmp.lt.s32.totalorder %s19, 1
        %s337 = scalar_select %p336, %s19, 1
        %p338 = scmp.lt.s32.totalorder %s20, 0
        %s339 = scalar_select %p338, %s20, 0
        %s340 = smul.addr %s337, 4
        %s341 = sadd.s32 %s339, %s340
        %s342 = smul.addr %s341, 8
        %s343 = scalar_lea.vmem %s4, %s342
        %v344 = vld [vmem:[%s298] sm:$0xff]
        %v345 = vld [vmem:[%s298 + $0x8] sm:$0xff]
        %v346 = vld [vmem:[%s298 + $0x10] sm:$0xff]
        %v347 = vld [vmem:[%s298 + $0x18] sm:$0xff]
        %348 = vst [vmem:[#allocation2] sm:$0xff] %v344
        %349 = vst [vmem:[#allocation2 + $0x10] sm:$0xff] %v345
        %350 = vst [vmem:[#allocation2 + $0x20] sm:$0xff] %v346
        %351 = vst [vmem:[#allocation2 + $0x30] sm:$0xff] %v347
        %v352 = vld [vmem:[%s305] sm:$0xff]
        %v353 = vld [vmem:[%s305 + $0x8] sm:$0xff]
        %v354 = vld [vmem:[%s305 + $0x10] sm:$0xff]
        %v355 = vld [vmem:[%s305 + $0x18] sm:$0xff]
        %356 = vst [vmem:[#allocation2 + $0x8] sm:$0xff] %v352
        %357 = vst [vmem:[#allocation2 + $0x18] sm:$0xff] %v353
        %358 = vst [vmem:[#allocation2 + $0x28] sm:$0xff] %v354
        %359 = vst [vmem:[#allocation2 + $0x38] sm:$0xff] %v355
        %v360 = vld [vmem:[%s2] sm:$0xff]
        %v361 = vld [vmem:[%s2 + $0x8] sm:$0xff]
        %v362 = vld [vmem:[%s2 + $0x10] sm:$0xff]
        %v363 = vld [vmem:[%s2 + $0x18] sm:$0xff]
        %v364 = vld [vmem:[%s2 + $0x20] sm:$0xff]
        %v365 = vld [vmem:[%s2 + $0x28] sm:$0xff]
        %v366 = vld [vmem:[%s2 + $0x30] sm:$0xff]
        %v367 = vld [vmem:[%s2 + $0x38] sm:$0xff]
        %v368 = vld [vmem:[%s2 + $0x40] sm:$0xff]
        %v369 = vld [vmem:[%s2 + $0x48] sm:$0xff]
        %v370 = vld [vmem:[%s2 + $0x50] sm:$0xff]
        %v371 = vld [vmem:[%s2 + $0x58] sm:$0xff]
        %v372 = vld [vmem:[%s2 + $0x60] sm:$0xff]
        %v373 = vld [vmem:[%s2 + $0x68] sm:$0xff]
        %v374 = vld [vmem:[%s2 + $0x70] sm:$0xff]
        %v375 = vld [vmem:[%s2 + $0x78] sm:$0xff]
        %v376 = vld [vmem:[%s2 + $0x80] sm:$0xff]
        %v377 = vld [vmem:[%s2 + $0x88] sm:$0xff]
        %v378 = vld [vmem:[#allocation2] sm:$0xff]
        %v379 = vld [vmem:[#allocation2 + $0x10] sm:$0xff]
        %v380 = vld [vmem:[#allocation2 + $0x20] sm:$0xff]
        %v381 = vld [vmem:[#allocation2 + $0x30] sm:$0xff]
        %s382 = scalar_lea.vmem %s2, 144
        %v383 = vld [vmem:[%s382] sm:$0xff]
        %v384 = vld [vmem:[%s382 + $0x8] sm:$0xff]
        %v385 = vld [vmem:[%s382 + $0x10] sm:$0xff]
        %v386 = vld [vmem:[%s382 + $0x18] sm:$0xff]
        %v387 = vld [vmem:[%s382 + $0x20] sm:$0xff]
        %v388 = vld [vmem:[%s382 + $0x28] sm:$0xff]
        %v389 = vld [vmem:[%s382 + $0x30] sm:$0xff]
        %v390 = vld [vmem:[%s382 + $0x38] sm:$0xff]
        %v391 = vld [vmem:[%s382 + $0x40] sm:$0xff]
        %v392 = vld [vmem:[%s382 + $0x48] sm:$0xff]
        %v393 = vld [vmem:[%s382 + $0x50] sm:$0xff]
        %v394 = vld [vmem:[%s382 + $0x58] sm:$0xff]
        %v395 = vld [vmem:[%s382 + $0x60] sm:$0xff]
        %v396 = vld [vmem:[%s382 + $0x68] sm:$0xff]
        %v397 = vld [vmem:[%s382 + $0x70] sm:$0xff]
        %v398 = vld [vmem:[%s382 + $0x78] sm:$0xff]
        %v399 = vld [vmem:[%s382 + $0x80] sm:$0xff]
        %v400 = vld [vmem:[%s382 + $0x88] sm:$0xff]
        %v401 = vld [vmem:[#allocation2] sm:$0xff]
        %v402 = vld [vmem:[#allocation2 + $0x8] sm:$0xff]
        %v403 = vld [vmem:[#allocation2 + $0x10] sm:$0xff]
        %v404 = vld [vmem:[#allocation2 + $0x18] sm:$0xff]
        %v405 = vld [vmem:[#allocation2 + $0x20] sm:$0xff]
        %v406 = vld [vmem:[#allocation2 + $0x28] sm:$0xff]
        %v407 = vld [vmem:[#allocation2 + $0x30] sm:$0xff]
        %v408 = vld [vmem:[#allocation2 + $0x38] sm:$0xff]
        %417 = vrot.lane.b32.xlu0 %v401, 127
        %v418 = vpop.permute.xlu0 %417
        %419 = vrot.lane.b32.xlu0 %v402, 127
        %v420 = vpop.permute.xlu0 %419
        %421 = vrot.lane.b32.xlu0 %v403, 127
        %v422 = vpop.permute.xlu0 %421
        %423 = vrot.lane.b32.xlu0 %v404, 127
        %v424 = vpop.permute.xlu0 %423
        %425 = vrot.lane.b32.xlu0 %v405, 127
        %v426 = vpop.permute.xlu0 %425
        %427 = vrot.lane.b32.xlu0 %v406, 127
        %v428 = vpop.permute.xlu0 %427
        %429 = vrot.lane.b32.xlu0 %v407, 127
        %v430 = vpop.permute.xlu0 %429
        %431 = vrot.lane.b32.xlu0 %v408, 127
        %v432 = vpop.permute.xlu0 %431
        %vm433 = vcmask 1039360
        %v434 = vsel %vm433, %v418, %v420
        %v435 = vsel %vm433, %v422, %v424
        %v436 = vsel %vm433, %v426, %v428
        %v437 = vsel %vm433, %v430, %v432
        %vm442 = vcmask 261120
        %v444 = vsel %vm442, %v383, 0
        %v447 = vsel %vm442, %v384, 0
        %v450 = vsel %vm442, %v385, 0
        %v453 = vsel %vm442, %v386, 0
        %v456 = vsel %vm442, %v387, 0
        %v459 = vsel %vm442, %v388, 0
        %v462 = vsel %vm442, %v389, 0
        %v465 = vsel %vm442, %v390, 0
        %v468 = vsel %vm442, %v391, 0
        %v471 = vsel %vm442, %v392, 0
        %v474 = vsel %vm442, %v393, 0
        %v477 = vsel %vm442, %v394, 0
        %v480 = vsel %vm442, %v395, 0
        %v483 = vsel %vm442, %v396, 0
        %v486 = vsel %vm442, %v397, 0
        %v489 = vsel %vm442, %v398, 0
        %v492 = vsel %vm442, %v399, 0
        %v495 = vsel %vm442, %v400, 0
        %497 = vmatprep.subr.mxu0 0.0
        %498 = vmatpush1.msra.mxu0 0.0
        %499 = vmatprep.subr.mxu0 0.0
        %500 = vmatpush1.msra.mxu0 0.0
        %501 = vmatprep.subr.mxu0 0.0
        %502 = vmatpush1.msra.mxu0 0.0
        %503 = vmatprep.subr.mxu0 0.0
        %504 = vmatpush1.msra.mxu0 0.0
        %505 = vmatprep.subr.mxu0 0.0
        %506 = vmatpush1.msra.mxu0 0.0
        %507 = vmatprep.subr.mxu0 0.0
        %508 = vmatpush1.msra.mxu0 0.0
        %509 = vmatprep.subr.mxu0 0.0
        %510 = vmatpush1.msra.mxu0 0.0
        %511 = vmatprep.subr.mxu0 0.0
        %512 = vmatpush1.msra.mxu0 0.0
        %513 = vmatprep.subr.mxu0 0.0
        %514 = vmatpush1.msra.mxu0 0.0
        %515 = vmatprep.subr.mxu0 0.0
        %516 = vmatpush1.msra.mxu0 0.0
        %517 = vmatprep.subr.mxu0 0.0
        %518 = vmatpush1.msra.mxu0 0.0
        %519 = vmatprep.subr.mxu0 0.0
        %520 = vmatpush1.msra.mxu0 0.0
        %521 = vmatprep.subr.mxu0 0.0
        %522 = vmatpush1.msra.mxu0 %v437
        %523 = vmatprep.subr.mxu0 0.0
        %524 = vmatpush1.msra.mxu0 %v436
        %525 = vmatprep.subr.mxu0 0.0
        %526 = vmatpush1.msra.mxu0 %v435
        %527 = vmatprep.subr.mxu0 0.0
        %528 = vmatpush1.msra.mxu0 %v434
        %529 = vmatprep.subr.mxu0 0.0
        %530 = vmatpush2.msra.mxu0 0.0
        %531 = vmatprep.subr.mxu0 0.0
        %532 = vmatpush2.msra.mxu0 0.0
        %533 = vmatprep.subr.mxu0 0.0
        %534 = vmatpush2.msra.mxu0 0.0
        %535 = vmatprep.subr.mxu0 0.0
        %536 = vmatpush2.msra.mxu0 0.0
        %537 = vmatprep.subr.mxu0 0.0
        %538 = vmatpush2.msra.mxu0 0.0
        %539 = vmatprep.subr.mxu0 0.0
        %540 = vmatpush2.msra.mxu0 0.0
        %541 = vmatprep.subr.mxu0 0.0
        %542 = vmatpush2.msra.mxu0 0.0
        %543 = vmatprep.subr.mxu0 0.0
        %544 = vmatpush2.msra.mxu0 0.0
        %545 = vmatprep.subr.mxu0 0.0
        %546 = vmatpush2.msra.mxu0 0.0
        %547 = vmatprep.subr.mxu0 0.0
        %548 = vmatpush2.msra.mxu0 0.0
        %549 = vmatprep.subr.mxu0 0.0
        %550 = vmatpush2.msra.mxu0 0.0
        %551 = vmatprep.subr.mxu0 0.0
        %552 = vmatpush2.msra.mxu0 0.0
        %553 = vmatprep.subr.mxu0 0.0
        %554 = vmatpush2.msra.mxu0 0.0
        %555 = vmatprep.subr.mxu0 0.0
        %556 = vmatpush2.msra.mxu0 0.0
        %557 = vmatprep.subr.mxu0 0.0
        %558 = vmatpush2.msra.mxu0 0.0
        %559 = vmatprep.subr.mxu0 0.0
        %560 = vmatpush2.msra.mxu0 0.0
        %561 = vmatprep.mubr.f32.mxu0 0.0
        %562 = vmatmul.mubr.f32.gmra.mxu0 %v444
        %v563 = vpop.f32.mrf.mxu0
        %v564 = vadd.f32 0.0, %v563
        %v565 = vpop.f32.mrf.mxu0
        %566 = vmatprep.mubr.f32.mxu0 0.0
        %567 = vmatmul.mubr.f32.gmra.mxu0 %v447
        %v568 = vpop.f32.mrf.mxu0
        %v569 = vadd.f32 0.0, %v568
        %v570 = vpop.f32.mrf.mxu0
        %571 = vmatprep.mubr.f32.mxu0 0.0
        %572 = vmatmul.mubr.f32.gmra.mxu0 %v450
        %v573 = vpop.f32.mrf.mxu0
        %v574 = vadd.f32 0.0, %v573
        %v575 = vpop.f32.mrf.mxu0
        %576 = vmatprep.mubr.f32.mxu0 0.0
        %577 = vmatmul.mubr.f32.gmra.mxu0 %v453
        %v578 = vpop.f32.mrf.mxu0
        %v579 = vadd.f32 0.0, %v578
        %v580 = vpop.f32.mrf.mxu0
        %581 = vmatprep.mubr.f32.mxu0 0.0
        %582 = vmatmul.mubr.f32.gmra.mxu0 %v456
        %v583 = vpop.f32.mrf.mxu0
        %v584 = vadd.f32 0.0, %v583
        %v585 = vpop.f32.mrf.mxu0
        %586 = vmatprep.mubr.f32.mxu0 0.0
        %587 = vmatmul.mubr.f32.gmra.mxu0 %v459
        %v588 = vpop.f32.mrf.mxu0
        %v589 = vadd.f32 0.0, %v588
        %v590 = vpop.f32.mrf.mxu0
        %591 = vmatprep.mubr.f32.mxu0 0.0
        %592 = vmatmul.mubr.f32.gmra.mxu0 %v462
        %v593 = vpop.f32.mrf.mxu0
        %v594 = vadd.f32 0.0, %v593
        %v595 = vpop.f32.mrf.mxu0
        %596 = vmatprep.mubr.f32.mxu0 0.0
        %597 = vmatmul.mubr.f32.gmra.mxu0 %v465
        %v598 = vpop.f32.mrf.mxu0
        %v599 = vadd.f32 0.0, %v598
        %v600 = vpop.f32.mrf.mxu0
        %601 = vmatprep.mubr.f32.mxu0 0.0
        %602 = vmatmul.mubr.f32.gmra.mxu0 %v468
        %v603 = vpop.f32.mrf.mxu0
        %v604 = vadd.f32 0.0, %v603
        %v605 = vpop.f32.mrf.mxu0
        %606 = vmatprep.mubr.f32.mxu0 0.0
        %607 = vmatmul.mubr.f32.gmra.mxu0 %v471
        %v608 = vpop.f32.mrf.mxu0
        %v609 = vadd.f32 0.0, %v608
        %v610 = vpop.f32.mrf.mxu0
        %611 = vmatprep.mubr.f32.mxu0 0.0
        %612 = vmatmul.mubr.f32.gmra.mxu0 %v474
        %v613 = vpop.f32.mrf.mxu0
        %v614 = vadd.f32 0.0, %v613
        %v615 = vpop.f32.mrf.mxu0
        %616 = vmatprep.mubr.f32.mxu0 0.0
        %617 = vmatmul.mubr.f32.gmra.mxu0 %v477
        %v618 = vpop.f32.mrf.mxu0
        %v619 = vadd.f32 0.0, %v618
        %v620 = vpop.f32.mrf.mxu0
        %621 = vmatprep.mubr.f32.mxu0 0.0
        %622 = vmatmul.mubr.f32.gmra.mxu0 %v480
        %v623 = vpop.f32.mrf.mxu0
        %v624 = vadd.f32 0.0, %v623
        %v625 = vpop.f32.mrf.mxu0
        %626 = vmatprep.mubr.f32.mxu0 0.0
        %627 = vmatmul.mubr.f32.gmra.mxu0 %v483
        %v628 = vpop.f32.mrf.mxu0
        %v629 = vadd.f32 0.0, %v628
        %v630 = vpop.f32.mrf.mxu0
        %631 = vmatprep.mubr.f32.mxu0 0.0
        %632 = vmatmul.mubr.f32.gmra.mxu0 %v486
        %v633 = vpop.f32.mrf.mxu0
        %v634 = vadd.f32 0.0, %v633
        %v635 = vpop.f32.mrf.mxu0
        %636 = vmatprep.mubr.f32.mxu0 0.0
        %637 = vmatmul.mubr.f32.gmra.mxu0 %v489
        %v638 = vpop.f32.mrf.mxu0
        %v639 = vadd.f32 0.0, %v638
        %v640 = vpop.f32.mrf.mxu0
        %641 = vmatprep.mubr.f32.mxu0 0.0
        %642 = vmatmul.mubr.f32.gmra.mxu0 %v492
        %v643 = vpop.f32.mrf.mxu0
        %v644 = vadd.f32 0.0, %v643
        %v645 = vpop.f32.mrf.mxu0
        %646 = vmatprep.mubr.f32.mxu0 0.0
        %647 = vmatmul.mubr.f32.gmra.mxu0 %v495
        %v648 = vpop.f32.mrf.mxu0
        %v649 = vadd.f32 0.0, %v648
        %v650 = vpop.f32.mrf.mxu0
        %651 = vdwg.mxu0
        %v653 = vsel %vm442, %v360, 0
        %v656 = vsel %vm442, %v361, 0
        %v659 = vsel %vm442, %v362, 0
        %v662 = vsel %vm442, %v363, 0
        %v665 = vsel %vm442, %v364, 0
        %v668 = vsel %vm442, %v365, 0
        %v671 = vsel %vm442, %v366, 0
        %v674 = vsel %vm442, %v367, 0
        %v677 = vsel %vm442, %v368, 0
        %v680 = vsel %vm442, %v369, 0
        %v683 = vsel %vm442, %v370, 0
        %v686 = vsel %vm442, %v371, 0
        %v689 = vsel %vm442, %v372, 0
        %v692 = vsel %vm442, %v373, 0
        %v695 = vsel %vm442, %v374, 0
        %v698 = vsel %vm442, %v375, 0
        %v701 = vsel %vm442, %v376, 0
        %v704 = vsel %vm442, %v377, 0
        %706 = vmatprep.subr.mxu0 0.0
        %707 = vmatpush1.msra.mxu0 0.0
        %708 = vmatprep.subr.mxu0 0.0
        %709 = vmatpush1.msra.mxu0 0.0
        %710 = vmatprep.subr.mxu0 0.0
        %711 = vmatpush1.msra.mxu0 0.0
        %712 = vmatprep.subr.mxu0 0.0
        %713 = vmatpush1.msra.mxu0 0.0
        %714 = vmatprep.subr.mxu0 0.0
        %715 = vmatpush1.msra.mxu0 0.0
        %716 = vmatprep.subr.mxu0 0.0
        %717 = vmatpush1.msra.mxu0 0.0
        %718 = vmatprep.subr.mxu0 0.0
        %719 = vmatpush1.msra.mxu0 0.0
        %720 = vmatprep.subr.mxu0 0.0
        %721 = vmatpush1.msra.mxu0 0.0
        %722 = vmatprep.subr.mxu0 0.0
        %723 = vmatpush1.msra.mxu0 0.0
        %724 = vmatprep.subr.mxu0 0.0
        %725 = vmatpush1.msra.mxu0 0.0
        %726 = vmatprep.subr.mxu0 0.0
        %727 = vmatpush1.msra.mxu0 0.0
        %728 = vmatprep.subr.mxu0 0.0
        %729 = vmatpush1.msra.mxu0 0.0
        %730 = vmatprep.subr.mxu0 0.0
        %731 = vmatpush1.msra.mxu0 %v381
        %732 = vmatprep.subr.mxu0 0.0
        %733 = vmatpush1.msra.mxu0 %v380
        %734 = vmatprep.subr.mxu0 0.0
        %735 = vmatpush1.msra.mxu0 %v379
        %736 = vmatprep.subr.mxu0 0.0
        %737 = vmatpush1.msra.mxu0 %v378
        %738 = vmatprep.subr.mxu0 0.0
        %739 = vmatpush2.msra.mxu0 0.0
        %740 = vmatprep.subr.mxu0 0.0
        %741 = vmatpush2.msra.mxu0 0.0
        %742 = vmatprep.subr.mxu0 0.0
        %743 = vmatpush2.msra.mxu0 0.0
        %744 = vmatprep.subr.mxu0 0.0
        %745 = vmatpush2.msra.mxu0 0.0
        %746 = vmatprep.subr.mxu0 0.0
        %747 = vmatpush2.msra.mxu0 0.0
        %748 = vmatprep.subr.mxu0 0.0
        %749 = vmatpush2.msra.mxu0 0.0
        %750 = vmatprep.subr.mxu0 0.0
        %751 = vmatpush2.msra.mxu0 0.0
        %752 = vmatprep.subr.mxu0 0.0
        %753 = vmatpush2.msra.mxu0 0.0
        %754 = vmatprep.subr.mxu0 0.0
        %755 = vmatpush2.msra.mxu0 0.0
        %756 = vmatprep.subr.mxu0 0.0
        %757 = vmatpush2.msra.mxu0 0.0
        %758 = vmatprep.subr.mxu0 0.0
        %759 = vmatpush2.msra.mxu0 0.0
        %760 = vmatprep.subr.mxu0 0.0
        %761 = vmatpush2.msra.mxu0 0.0
        %762 = vmatprep.subr.mxu0 0.0
        %763 = vmatpush2.msra.mxu0 0.0
        %764 = vmatprep.subr.mxu0 0.0
        %765 = vmatpush2.msra.mxu0 0.0
        %766 = vmatprep.subr.mxu0 0.0
        %767 = vmatpush2.msra.mxu0 0.0
        %768 = vmatprep.subr.mxu0 0.0
        %769 = vmatpush2.msra.mxu0 0.0
        %770 = vmatprep.mubr.f32.mxu0 0.0
        %771 = vmatmul.mubr.f32.gmra.mxu0 %v653
        %v772 = vpop.f32.mrf.mxu0
        %v773 = vadd.f32 %v564, %v772
        %v774 = vpop.f32.mrf.mxu0
        %775 = vmatprep.mubr.f32.mxu0 0.0
        %776 = vmatmul.mubr.f32.gmra.mxu0 %v656
        %v777 = vpop.f32.mrf.mxu0
        %v778 = vadd.f32 %v569, %v777
        %v779 = vpop.f32.mrf.mxu0
        %780 = vmatprep.mubr.f32.mxu0 0.0
        %781 = vmatmul.mubr.f32.gmra.mxu0 %v659
        %v782 = vpop.f32.mrf.mxu0
        %v783 = vadd.f32 %v574, %v782
        %v784 = vpop.f32.mrf.mxu0
        %785 = vmatprep.mubr.f32.mxu0 0.0
        %786 = vmatmul.mubr.f32.gmra.mxu0 %v662
        %v787 = vpop.f32.mrf.mxu0
        %v788 = vadd.f32 %v579, %v787
        %v789 = vpop.f32.mrf.mxu0
        %790 = vmatprep.mubr.f32.mxu0 0.0
        %791 = vmatmul.mubr.f32.gmra.mxu0 %v665
        %v792 = vpop.f32.mrf.mxu0
        %v793 = vadd.f32 %v584, %v792
        %v794 = vpop.f32.mrf.mxu0
        %795 = vmatprep.mubr.f32.mxu0 0.0
        %796 = vmatmul.mubr.f32.gmra.mxu0 %v668
        %v797 = vpop.f32.mrf.mxu0
        %v798 = vadd.f32 %v589, %v797
        %v799 = vpop.f32.mrf.mxu0
        %800 = vmatprep.mubr.f32.mxu0 0.0
        %801 = vmatmul.mubr.f32.gmra.mxu0 %v671
        %v802 = vpop.f32.mrf.mxu0
        %v803 = vadd.f32 %v594, %v802
        %v804 = vpop.f32.mrf.mxu0
        %805 = vmatprep.mubr.f32.mxu0 0.0
        %806 = vmatmul.mubr.f32.gmra.mxu0 %v674
        %v807 = vpop.f32.mrf.mxu0
        %v808 = vadd.f32 %v599, %v807
        %v809 = vpop.f32.mrf.mxu0
        %810 = vmatprep.mubr.f32.mxu0 0.0
        %811 = vmatmul.mubr.f32.gmra.mxu0 %v677
        %v812 = vpop.f32.mrf.mxu0
        %v813 = vadd.f32 %v604, %v812
        %v814 = vpop.f32.mrf.mxu0
        %815 = vmatprep.mubr.f32.mxu0 0.0
        %816 = vmatmul.mubr.f32.gmra.mxu0 %v680
        %v817 = vpop.f32.mrf.mxu0
        %v818 = vadd.f32 %v609, %v817
        %v819 = vpop.f32.mrf.mxu0
        %820 = vmatprep.mubr.f32.mxu0 0.0
        %821 = vmatmul.mubr.f32.gmra.mxu0 %v683
        %v822 = vpop.f32.mrf.mxu0
        %v823 = vadd.f32 %v614, %v822
        %v824 = vpop.f32.mrf.mxu0
        %825 = vmatprep.mubr.f32.mxu0 0.0
        %826 = vmatmul.mubr.f32.gmra.mxu0 %v686
        %v827 = vpop.f32.mrf.mxu0
        %v828 = vadd.f32 %v619, %v827
        %v829 = vpop.f32.mrf.mxu0
        %830 = vmatprep.mubr.f32.mxu0 0.0
        %831 = vmatmul.mubr.f32.gmra.mxu0 %v689
        %v832 = vpop.f32.mrf.mxu0
        %v833 = vadd.f32 %v624, %v832
        %v834 = vpop.f32.mrf.mxu0
        %835 = vmatprep.mubr.f32.mxu0 0.0
        %836 = vmatmul.mubr.f32.gmra.mxu0 %v692
        %v837 = vpop.f32.mrf.mxu0
        %v838 = vadd.f32 %v629, %v837
        %v839 = vpop.f32.mrf.mxu0
        %840 = vmatprep.mubr.f32.mxu0 0.0
        %841 = vmatmul.mubr.f32.gmra.mxu0 %v695
        %v842 = vpop.f32.mrf.mxu0
        %v843 = vadd.f32 %v634, %v842
        %v844 = vpop.f32.mrf.mxu0
        %845 = vmatprep.mubr.f32.mxu0 0.0
        %846 = vmatmul.mubr.f32.gmra.mxu0 %v698
        %v847 = vpop.f32.mrf.mxu0
        %v848 = vadd.f32 %v639, %v847
        %v849 = vpop.f32.mrf.mxu0
        %850 = vmatprep.mubr.f32.mxu0 0.0
        %851 = vmatmul.mubr.f32.gmra.mxu0 %v701
        %v852 = vpop.f32.mrf.mxu0
        %v853 = vadd.f32 %v644, %v852
        %v854 = vpop.f32.mrf.mxu0
        %855 = vmatprep.mubr.f32.mxu0 0.0
        %856 = vmatmul.mubr.f32.gmra.mxu0 %v704
        %v857 = vpop.f32.mrf.mxu0
        %v858 = vadd.f32 %v649, %v857
        %v859 = vpop.f32.mrf.mxu0
        %860 = vdwg.mxu0
        %s861 = scalar_lea.vmem %s2, 288
        %v862 = vld [vmem:[%s861] sm:$0xff]
        %v863 = vld [vmem:[%s861 + $0x8] sm:$0xff]
        %v864 = vld [vmem:[%s861 + $0x10] sm:$0xff]
        %v865 = vld [vmem:[%s861 + $0x18] sm:$0xff]
        %v866 = vld [vmem:[%s861 + $0x20] sm:$0xff]
        %v867 = vld [vmem:[%s861 + $0x28] sm:$0xff]
        %v868 = vld [vmem:[%s861 + $0x30] sm:$0xff]
        %v869 = vld [vmem:[%s861 + $0x38] sm:$0xff]
        %v870 = vld [vmem:[%s861 + $0x40] sm:$0xff]
        %v871 = vld [vmem:[%s861 + $0x48] sm:$0xff]
        %v872 = vld [vmem:[%s861 + $0x50] sm:$0xff]
        %v873 = vld [vmem:[%s861 + $0x58] sm:$0xff]
        %v874 = vld [vmem:[%s861 + $0x60] sm:$0xff]
        %v875 = vld [vmem:[%s861 + $0x68] sm:$0xff]
        %v876 = vld [vmem:[%s861 + $0x70] sm:$0xff]
        %v877 = vld [vmem:[%s861 + $0x78] sm:$0xff]
        %v878 = vld [vmem:[%s861 + $0x80] sm:$0xff]
        %v879 = vld [vmem:[%s861 + $0x88] sm:$0xff]
        %880 = vrot.lane.b32.xlu0 %v401, 126
        %v881 = vpop.permute.xlu0 %880
        %882 = vrot.lane.b32.xlu0 %v402, 126
        %v883 = vpop.permute.xlu0 %882
        %884 = vrot.lane.b32.xlu0 %v403, 126
        %v885 = vpop.permute.xlu0 %884
        %886 = vrot.lane.b32.xlu0 %v404, 126
        %v887 = vpop.permute.xlu0 %886
        %888 = vrot.lane.b32.xlu0 %v405, 126
        %v889 = vpop.permute.xlu0 %888
        %890 = vrot.lane.b32.xlu0 %v406, 126
        %v891 = vpop.permute.xlu0 %890
        %892 = vrot.lane.b32.xlu0 %v407, 126
        %v893 = vpop.permute.xlu0 %892
        %894 = vrot.lane.b32.xlu0 %v408, 126
        %v895 = vpop.permute.xlu0 %894
        %vm896 = vcmask 1031168
        %v897 = vsel %vm896, %v881, %v883
        %v898 = vsel %vm896, %v885, %v887
        %v899 = vsel %vm896, %v889, %v891
        %v900 = vsel %vm896, %v893, %v895
        %v906 = vsel %vm442, %v862, 0
        %v909 = vsel %vm442, %v863, 0
        %v912 = vsel %vm442, %v864, 0
        %v915 = vsel %vm442, %v865, 0
        %v918 = vsel %vm442, %v866, 0
        %v921 = vsel %vm442, %v867, 0
        %v924 = vsel %vm442, %v868, 0
        %v927 = vsel %vm442, %v869, 0
        %v930 = vsel %vm442, %v870, 0
        %v933 = vsel %vm442, %v871, 0
        %v936 = vsel %vm442, %v872, 0
        %v939 = vsel %vm442, %v873, 0
        %v942 = vsel %vm442, %v874, 0
        %v945 = vsel %vm442, %v875, 0
        %v948 = vsel %vm442, %v876, 0
        %v951 = vsel %vm442, %v877, 0
        %v954 = vsel %vm442, %v878, 0
        %v957 = vsel %vm442, %v879, 0
        %959 = vmatprep.subr.mxu0 0.0
        %960 = vmatpush1.msra.mxu0 0.0
        %961 = vmatprep.subr.mxu0 0.0
        %962 = vmatpush1.msra.mxu0 0.0
        %963 = vmatprep.subr.mxu0 0.0
        %964 = vmatpush1.msra.mxu0 0.0
        %965 = vmatprep.subr.mxu0 0.0
        %966 = vmatpush1.msra.mxu0 0.0
        %967 = vmatprep.subr.mxu0 0.0
        %968 = vmatpush1.msra.mxu0 0.0
        %969 = vmatprep.subr.mxu0 0.0
        %970 = vmatpush1.msra.mxu0 0.0
        %971 = vmatprep.subr.mxu0 0.0
        %972 = vmatpush1.msra.mxu0 0.0
        %973 = vmatprep.subr.mxu0 0.0
        %974 = vmatpush1.msra.mxu0 0.0
        %975 = vmatprep.subr.mxu0 0.0
        %976 = vmatpush1.msra.mxu0 0.0
        %977 = vmatprep.subr.mxu0 0.0
        %978 = vmatpush1.msra.mxu0 0.0
        %979 = vmatprep.subr.mxu0 0.0
        %980 = vmatpush1.msra.mxu0 0.0
        %981 = vmatprep.subr.mxu0 0.0
        %982 = vmatpush1.msra.mxu0 0.0
        %983 = vmatprep.subr.mxu0 0.0
        %984 = vmatpush1.msra.mxu0 %v900
        %985 = vmatprep.subr.mxu0 0.0
        %986 = vmatpush1.msra.mxu0 %v899
        %987 = vmatprep.subr.mxu0 0.0
        %988 = vmatpush1.msra.mxu0 %v898
        %989 = vmatprep.subr.mxu0 0.0
        %990 = vmatpush1.msra.mxu0 %v897
        %991 = vmatprep.subr.mxu0 0.0
        %992 = vmatpush2.msra.mxu0 0.0
        %993 = vmatprep.subr.mxu0 0.0
        %994 = vmatpush2.msra.mxu0 0.0
        %995 = vmatprep.subr.mxu0 0.0
        %996 = vmatpush2.msra.mxu0 0.0
        %997 = vmatprep.subr.mxu0 0.0
        %998 = vmatpush2.msra.mxu0 0.0
        %999 = vmatprep.subr.mxu0 0.0
        %1000 = vmatpush2.msra.mxu0 0.0
        %1001 = vmatprep.subr.mxu0 0.0
        %1002 = vmatpush2.msra.mxu0 0.0
        %1003 = vmatprep.subr.mxu0 0.0
        %1004 = vmatpush2.msra.mxu0 0.0
        %1005 = vmatprep.subr.mxu0 0.0
        %1006 = vmatpush2.msra.mxu0 0.0
        %1007 = vmatprep.subr.mxu0 0.0
        %1008 = vmatpush2.msra.mxu0 0.0
        %1009 = vmatprep.subr.mxu0 0.0
        %1010 = vmatpush2.msra.mxu0 0.0
        %1011 = vmatprep.subr.mxu0 0.0
        %1012 = vmatpush2.msra.mxu0 0.0
        %1013 = vmatprep.subr.mxu0 0.0
        %1014 = vmatpush2.msra.mxu0 0.0
        %1015 = vmatprep.subr.mxu0 0.0
        %1016 = vmatpush2.msra.mxu0 0.0
        %1017 = vmatprep.subr.mxu0 0.0
        %1018 = vmatpush2.msra.mxu0 0.0
        %1019 = vmatprep.subr.mxu0 0.0
        %1020 = vmatpush2.msra.mxu0 0.0
        %1021 = vmatprep.subr.mxu0 0.0
        %1022 = vmatpush2.msra.mxu0 0.0
        %1023 = vmatprep.mubr.f32.mxu0 0.0
        %1024 = vmatmul.mubr.f32.gmra.mxu0 %v906
        %v1025 = vpop.f32.mrf.mxu0
        %v1026 = vadd.f32 0.0, %v1025
        %v1027 = vpop.f32.mrf.mxu0
        %1028 = vmatprep.mubr.f32.mxu0 0.0
        %1029 = vmatmul.mubr.f32.gmra.mxu0 %v909
        %v1030 = vpop.f32.mrf.mxu0
        %v1031 = vadd.f32 0.0, %v1030
        %v1032 = vpop.f32.mrf.mxu0
        %1033 = vmatprep.mubr.f32.mxu0 0.0
        %1034 = vmatmul.mubr.f32.gmra.mxu0 %v912
        %v1035 = vpop.f32.mrf.mxu0
        %v1036 = vadd.f32 0.0, %v1035
        %v1037 = vpop.f32.mrf.mxu0
        %1038 = vmatprep.mubr.f32.mxu0 0.0
        %1039 = vmatmul.mubr.f32.gmra.mxu0 %v915
        %v1040 = vpop.f32.mrf.mxu0
        %v1041 = vadd.f32 0.0, %v1040
        %v1042 = vpop.f32.mrf.mxu0
        %1043 = vmatprep.mubr.f32.mxu0 0.0
        %1044 = vmatmul.mubr.f32.gmra.mxu0 %v918
        %v1045 = vpop.f32.mrf.mxu0
        %v1046 = vadd.f32 0.0, %v1045
        %v1047 = vpop.f32.mrf.mxu0
        %1048 = vmatprep.mubr.f32.mxu0 0.0
        %1049 = vmatmul.mubr.f32.gmra.mxu0 %v921
        %v1050 = vpop.f32.mrf.mxu0
        %v1051 = vadd.f32 0.0, %v1050
        %v1052 = vpop.f32.mrf.mxu0
        %1053 = vmatprep.mubr.f32.mxu0 0.0
        %1054 = vmatmul.mubr.f32.gmra.mxu0 %v924
        %v1055 = vpop.f32.mrf.mxu0
        %v1056 = vadd.f32 0.0, %v1055
        %v1057 = vpop.f32.mrf.mxu0
        %1058 = vmatprep.mubr.f32.mxu0 0.0
        %1059 = vmatmul.mubr.f32.gmra.mxu0 %v927
        %v1060 = vpop.f32.mrf.mxu0
        %v1061 = vadd.f32 0.0, %v1060
        %v1062 = vpop.f32.mrf.mxu0
        %1063 = vmatprep.mubr.f32.mxu0 0.0
        %1064 = vmatmul.mubr.f32.gmra.mxu0 %v930
        %v1065 = vpop.f32.mrf.mxu0
        %v1066 = vadd.f32 0.0, %v1065
        %v1067 = vpop.f32.mrf.mxu0
        %1068 = vmatprep.mubr.f32.mxu0 0.0
        %1069 = vmatmul.mubr.f32.gmra.mxu0 %v933
        %v1070 = vpop.f32.mrf.mxu0
        %v1071 = vadd.f32 0.0, %v1070
        %v1072 = vpop.f32.mrf.mxu0
        %1073 = vmatprep.mubr.f32.mxu0 0.0
        %1074 = vmatmul.mubr.f32.gmra.mxu0 %v936
        %v1075 = vpop.f32.mrf.mxu0
        %v1076 = vadd.f32 0.0, %v1075
        %v1077 = vpop.f32.mrf.mxu0
        %1078 = vmatprep.mubr.f32.mxu0 0.0
        %1079 = vmatmul.mubr.f32.gmra.mxu0 %v939
        %v1080 = vpop.f32.mrf.mxu0
        %v1081 = vadd.f32 0.0, %v1080
        %v1082 = vpop.f32.mrf.mxu0
        %1083 = vmatprep.mubr.f32.mxu0 0.0
        %1084 = vmatmul.mubr.f32.gmra.mxu0 %v942
        %v1085 = vpop.f32.mrf.mxu0
        %v1086 = vadd.f32 0.0, %v1085
        %v1087 = vpop.f32.mrf.mxu0
        %1088 = vmatprep.mubr.f32.mxu0 0.0
        %1089 = vmatmul.mubr.f32.gmra.mxu0 %v945
        %v1090 = vpop.f32.mrf.mxu0
        %v1091 = vadd.f32 0.0, %v1090
        %v1092 = vpop.f32.mrf.mxu0
        %1093 = vmatprep.mubr.f32.mxu0 0.0
        %1094 = vmatmul.mubr.f32.gmra.mxu0 %v948
        %v1095 = vpop.f32.mrf.mxu0
        %v1096 = vadd.f32 0.0, %v1095
        %v1097 = vpop.f32.mrf.mxu0
        %1098 = vmatprep.mubr.f32.mxu0 0.0
        %1099 = vmatmul.mubr.f32.gmra.mxu0 %v951
        %v1100 = vpop.f32.mrf.mxu0
        %v1101 = vadd.f32 0.0, %v1100
        %v1102 = vpop.f32.mrf.mxu0
        %1103 = vmatprep.mubr.f32.mxu0 0.0
        %1104 = vmatmul.mubr.f32.gmra.mxu0 %v954
        %v1105 = vpop.f32.mrf.mxu0
        %v1106 = vadd.f32 0.0, %v1105
        %v1107 = vpop.f32.mrf.mxu0
        %1108 = vmatprep.mubr.f32.mxu0 0.0
        %1109 = vmatmul.mubr.f32.gmra.mxu0 %v957
        %v1110 = vpop.f32.mrf.mxu0
        %v1111 = vadd.f32 0.0, %v1110
        %v1112 = vpop.f32.mrf.mxu0
        %1113 = vdwg.mxu0
        %v1114 = vadd.f32 %v773, %v1026
        %v1115 = vadd.f32 %v778, %v1031
        %v1116 = vadd.f32 %v783, %v1036
        %v1117 = vadd.f32 %v788, %v1041
        %v1118 = vadd.f32 %v793, %v1046
        %v1119 = vadd.f32 %v798, %v1051
        %v1120 = vadd.f32 %v803, %v1056
        %v1121 = vadd.f32 %v808, %v1061
        %v1122 = vadd.f32 %v813, %v1066
        %v1123 = vadd.f32 %v818, %v1071
        %v1124 = vadd.f32 %v823, %v1076
        %v1125 = vadd.f32 %v828, %v1081
        %v1126 = vadd.f32 %v833, %v1086
        %v1127 = vadd.f32 %v838, %v1091
        %v1128 = vadd.f32 %v843, %v1096
        %v1129 = vadd.f32 %v848, %v1101
        %v1130 = vadd.f32 %v853, %v1106
        %v1131 = vadd.f32 %v858, %v1111
        %s1132 = scalar_lea.vmem %s2, 432
        %v1133 = vld [vmem:[%s1132] sm:$0xff]
        %v1134 = vld [vmem:[%s1132 + $0x8] sm:$0xff]
        %v1135 = vld [vmem:[%s1132 + $0x10] sm:$0xff]
        %v1136 = vld [vmem:[%s1132 + $0x18] sm:$0xff]
        %v1137 = vld [vmem:[%s1132 + $0x20] sm:$0xff]
        %v1138 = vld [vmem:[%s1132 + $0x28] sm:$0xff]
        %v1139 = vld [vmem:[%s1132 + $0x30] sm:$0xff]
        %v1140 = vld [vmem:[%s1132 + $0x38] sm:$0xff]
        %v1141 = vld [vmem:[%s1132 + $0x40] sm:$0xff]
        %v1142 = vld [vmem:[%s1132 + $0x48] sm:$0xff]
        %v1143 = vld [vmem:[%s1132 + $0x50] sm:$0xff]
        %v1144 = vld [vmem:[%s1132 + $0x58] sm:$0xff]
        %v1145 = vld [vmem:[%s1132 + $0x60] sm:$0xff]
        %v1146 = vld [vmem:[%s1132 + $0x68] sm:$0xff]
        %v1147 = vld [vmem:[%s1132 + $0x70] sm:$0xff]
        %v1148 = vld [vmem:[%s1132 + $0x78] sm:$0xff]
        %v1149 = vld [vmem:[%s1132 + $0x80] sm:$0xff]
        %v1150 = vld [vmem:[%s1132 + $0x88] sm:$0xff]
        %1151 = vrot.lane.b32.xlu0 %v401, 125
        %v1152 = vpop.permute.xlu0 %1151
        %1153 = vrot.lane.b32.xlu0 %v402, 125
        %v1154 = vpop.permute.xlu0 %1153
        %1155 = vrot.lane.b32.xlu0 %v403, 125
        %v1156 = vpop.permute.xlu0 %1155
        %1157 = vrot.lane.b32.xlu0 %v404, 125
        %v1158 = vpop.permute.xlu0 %1157
        %1159 = vrot.lane.b32.xlu0 %v405, 125
        %v1160 = vpop.permute.xlu0 %1159
        %1161 = vrot.lane.b32.xlu0 %v406, 125
        %v1162 = vpop.permute.xlu0 %1161
        %1163 = vrot.lane.b32.xlu0 %v407, 125
        %v1164 = vpop.permute.xlu0 %1163
        %1165 = vrot.lane.b32.xlu0 %v408, 125
        %v1166 = vpop.permute.xlu0 %1165
        %vm1167 = vcmask 1022976
        %v1168 = vsel %vm1167, %v1152, %v1154
        %v1169 = vsel %vm1167, %v1156, %v1158
        %v1170 = vsel %vm1167, %v1160, %v1162
        %v1171 = vsel %vm1167, %v1164, %v1166
        %v1177 = vsel %vm442, %v1133, 0
        %v1180 = vsel %vm442, %v1134, 0
        %v1183 = vsel %vm442, %v1135, 0
        %v1186 = vsel %vm442, %v1136, 0
        %v1189 = vsel %vm442, %v1137, 0
        %v1192 = vsel %vm442, %v1138, 0
        %v1195 = vsel %vm442, %v1139, 0
        %v1198 = vsel %vm442, %v1140, 0
        %v1201 = vsel %vm442, %v1141, 0
        %v1204 = vsel %vm442, %v1142, 0
        %v1207 = vsel %vm442, %v1143, 0
        %v1210 = vsel %vm442, %v1144, 0
        %v1213 = vsel %vm442, %v1145, 0
        %v1216 = vsel %vm442, %v1146, 0
        %v1219 = vsel %vm442, %v1147, 0
        %v1222 = vsel %vm442, %v1148, 0
        %v1225 = vsel %vm442, %v1149, 0
        %v1228 = vsel %vm442, %v1150, 0
        %1230 = vmatprep.subr.mxu0 0.0
        %1231 = vmatpush1.msra.mxu0 0.0
        %1232 = vmatprep.subr.mxu0 0.0
        %1233 = vmatpush1.msra.mxu0 0.0
        %1234 = vmatprep.subr.mxu0 0.0
        %1235 = vmatpush1.msra.mxu0 0.0
        %1236 = vmatprep.subr.mxu0 0.0
        %1237 = vmatpush1.msra.mxu0 0.0
        %1238 = vmatprep.subr.mxu0 0.0
        %1239 = vmatpush1.msra.mxu0 0.0
        %1240 = vmatprep.subr.mxu0 0.0
        %1241 = vmatpush1.msra.mxu0 0.0
        %1242 = vmatprep.subr.mxu0 0.0
        %1243 = vmatpush1.msra.mxu0 0.0
        %1244 = vmatprep.subr.mxu0 0.0
        %1245 = vmatpush1.msra.mxu0 0.0
        %1246 = vmatprep.subr.mxu0 0.0
        %1247 = vmatpush1.msra.mxu0 0.0
        %1248 = vmatprep.subr.mxu0 0.0
        %1249 = vmatpush1.msra.mxu0 0.0
        %1250 = vmatprep.subr.mxu0 0.0
        %1251 = vmatpush1.msra.mxu0 0.0
        %1252 = vmatprep.subr.mxu0 0.0
        %1253 = vmatpush1.msra.mxu0 0.0
        %1254 = vmatprep.subr.mxu0 0.0
        %1255 = vmatpush1.msra.mxu0 %v1171
        %1256 = vmatprep.subr.mxu0 0.0
        %1257 = vmatpush1.msra.mxu0 %v1170
        %1258 = vmatprep.subr.mxu0 0.0
        %1259 = vmatpush1.msra.mxu0 %v1169
        %1260 = vmatprep.subr.mxu0 0.0
        %1261 = vmatpush1.msra.mxu0 %v1168
        %1262 = vmatprep.subr.mxu0 0.0
        %1263 = vmatpush2.msra.mxu0 0.0
        %1264 = vmatprep.subr.mxu0 0.0
        %1265 = vmatpush2.msra.mxu0 0.0
        %1266 = vmatprep.subr.mxu0 0.0
        %1267 = vmatpush2.msra.mxu0 0.0
        %1268 = vmatprep.subr.mxu0 0.0
        %1269 = vmatpush2.msra.mxu0 0.0
        %1270 = vmatprep.subr.mxu0 0.0
        %1271 = vmatpush2.msra.mxu0 0.0
        %1272 = vmatprep.subr.mxu0 0.0
        %1273 = vmatpush2.msra.mxu0 0.0
        %1274 = vmatprep.subr.mxu0 0.0
        %1275 = vmatpush2.msra.mxu0 0.0
        %1276 = vmatprep.subr.mxu0 0.0
        %1277 = vmatpush2.msra.mxu0 0.0
        %1278 = vmatprep.subr.mxu0 0.0
        %1279 = vmatpush2.msra.mxu0 0.0
        %1280 = vmatprep.subr.mxu0 0.0
        %1281 = vmatpush2.msra.mxu0 0.0
        %1282 = vmatprep.subr.mxu0 0.0
        %1283 = vmatpush2.msra.mxu0 0.0
        %1284 = vmatprep.subr.mxu0 0.0
        %1285 = vmatpush2.msra.mxu0 0.0
        %1286 = vmatprep.subr.mxu0 0.0
        %1287 = vmatpush2.msra.mxu0 0.0
        %1288 = vmatprep.subr.mxu0 0.0
        %1289 = vmatpush2.msra.mxu0 0.0
        %1290 = vmatprep.subr.mxu0 0.0
        %1291 = vmatpush2.msra.mxu0 0.0
        %1292 = vmatprep.subr.mxu0 0.0
        %1293 = vmatpush2.msra.mxu0 0.0
        %1294 = vmatprep.mubr.f32.mxu0 0.0
        %1295 = vmatmul.mubr.f32.gmra.mxu0 %v1177
        %v1296 = vpop.f32.mrf.mxu0
        %v1297 = vadd.f32 0.0, %v1296
        %v1298 = vpop.f32.mrf.mxu0
        %1299 = vmatprep.mubr.f32.mxu0 0.0
        %1300 = vmatmul.mubr.f32.gmra.mxu0 %v1180
        %v1301 = vpop.f32.mrf.mxu0
        %v1302 = vadd.f32 0.0, %v1301
        %v1303 = vpop.f32.mrf.mxu0
        %1304 = vmatprep.mubr.f32.mxu0 0.0
        %1305 = vmatmul.mubr.f32.gmra.mxu0 %v1183
        %v1306 = vpop.f32.mrf.mxu0
        %v1307 = vadd.f32 0.0, %v1306
        %v1308 = vpop.f32.mrf.mxu0
        %1309 = vmatprep.mubr.f32.mxu0 0.0
        %1310 = vmatmul.mubr.f32.gmra.mxu0 %v1186
        %v1311 = vpop.f32.mrf.mxu0
        %v1312 = vadd.f32 0.0, %v1311
        %v1313 = vpop.f32.mrf.mxu0
        %1314 = vmatprep.mubr.f32.mxu0 0.0
        %1315 = vmatmul.mubr.f32.gmra.mxu0 %v1189
        %v1316 = vpop.f32.mrf.mxu0
        %v1317 = vadd.f32 0.0, %v1316
        %v1318 = vpop.f32.mrf.mxu0
        %1319 = vmatprep.mubr.f32.mxu0 0.0
        %1320 = vmatmul.mubr.f32.gmra.mxu0 %v1192
        %v1321 = vpop.f32.mrf.mxu0
        %v1322 = vadd.f32 0.0, %v1321
        %v1323 = vpop.f32.mrf.mxu0
        %1324 = vmatprep.mubr.f32.mxu0 0.0
        %1325 = vmatmul.mubr.f32.gmra.mxu0 %v1195
        %v1326 = vpop.f32.mrf.mxu0
        %v1327 = vadd.f32 0.0, %v1326
        %v1328 = vpop.f32.mrf.mxu0
        %1329 = vmatprep.mubr.f32.mxu0 0.0
        %1330 = vmatmul.mubr.f32.gmra.mxu0 %v1198
        %v1331 = vpop.f32.mrf.mxu0
        %v1332 = vadd.f32 0.0, %v1331
        %v1333 = vpop.f32.mrf.mxu0
        %1334 = vmatprep.mubr.f32.mxu0 0.0
        %1335 = vmatmul.mubr.f32.gmra.mxu0 %v1201
        %v1336 = vpop.f32.mrf.mxu0
        %v1337 = vadd.f32 0.0, %v1336
        %v1338 = vpop.f32.mrf.mxu0
        %1339 = vmatprep.mubr.f32.mxu0 0.0
        %1340 = vmatmul.mubr.f32.gmra.mxu0 %v1204
        %v1341 = vpop.f32.mrf.mxu0
        %v1342 = vadd.f32 0.0, %v1341
        %v1343 = vpop.f32.mrf.mxu0
        %1344 = vmatprep.mubr.f32.mxu0 0.0
        %1345 = vmatmul.mubr.f32.gmra.mxu0 %v1207
        %v1346 = vpop.f32.mrf.mxu0
        %v1347 = vadd.f32 0.0, %v1346
        %v1348 = vpop.f32.mrf.mxu0
        %1349 = vmatprep.mubr.f32.mxu0 0.0
        %1350 = vmatmul.mubr.f32.gmra.mxu0 %v1210
        %v1351 = vpop.f32.mrf.mxu0
        %v1352 = vadd.f32 0.0, %v1351
        %v1353 = vpop.f32.mrf.mxu0
        %1354 = vmatprep.mubr.f32.mxu0 0.0
        %1355 = vmatmul.mubr.f32.gmra.mxu0 %v1213
        %v1356 = vpop.f32.mrf.mxu0
        %v1357 = vadd.f32 0.0, %v1356
        %v1358 = vpop.f32.mrf.mxu0
        %1359 = vmatprep.mubr.f32.mxu0 0.0
        %1360 = vmatmul.mubr.f32.gmra.mxu0 %v1216
        %v1361 = vpop.f32.mrf.mxu0
        %v1362 = vadd.f32 0.0, %v1361
        %v1363 = vpop.f32.mrf.mxu0
        %1364 = vmatprep.mubr.f32.mxu0 0.0
        %1365 = vmatmul.mubr.f32.gmra.mxu0 %v1219
        %v1366 = vpop.f32.mrf.mxu0
        %v1367 = vadd.f32 0.0, %v1366
        %v1368 = vpop.f32.mrf.mxu0
        %1369 = vmatprep.mubr.f32.mxu0 0.0
        %1370 = vmatmul.mubr.f32.gmra.mxu0 %v1222
        %v1371 = vpop.f32.mrf.mxu0
        %v1372 = vadd.f32 0.0, %v1371
        %v1373 = vpop.f32.mrf.mxu0
        %1374 = vmatprep.mubr.f32.mxu0 0.0
        %1375 = vmatmul.mubr.f32.gmra.mxu0 %v1225
        %v1376 = vpop.f32.mrf.mxu0
        %v1377 = vadd.f32 0.0, %v1376
        %v1378 = vpop.f32.mrf.mxu0
        %1379 = vmatprep.mubr.f32.mxu0 0.0
        %1380 = vmatmul.mubr.f32.gmra.mxu0 %v1228
        %v1381 = vpop.f32.mrf.mxu0
        %v1382 = vadd.f32 0.0, %v1381
        %v1383 = vpop.f32.mrf.mxu0
        %1384 = vdwg.mxu0
        %v1385 = vadd.f32 %v1114, %v1297
        %v1386 = vadd.f32 %v1115, %v1302
        %v1387 = vadd.f32 %v1116, %v1307
        %v1388 = vadd.f32 %v1117, %v1312
        %v1389 = vadd.f32 %v1118, %v1317
        %v1390 = vadd.f32 %v1119, %v1322
        %v1391 = vadd.f32 %v1120, %v1327
        %v1392 = vadd.f32 %v1121, %v1332
        %v1393 = vadd.f32 %v1122, %v1337
        %v1394 = vadd.f32 %v1123, %v1342
        %v1395 = vadd.f32 %v1124, %v1347
        %v1396 = vadd.f32 %v1125, %v1352
        %v1397 = vadd.f32 %v1126, %v1357
        %v1398 = vadd.f32 %v1127, %v1362
        %v1399 = vadd.f32 %v1128, %v1367
        %v1400 = vadd.f32 %v1129, %v1372
        %v1401 = vadd.f32 %v1130, %v1377
        %v1402 = vadd.f32 %v1131, %v1382
        %v1403 = vmul.f32 %v1385, %v1385
        %v1404 = vmul.f32 %v1386, %v1386
        %v1405 = vmul.f32 %v1387, %v1387
        %v1406 = vmul.f32 %v1388, %v1388
        %v1407 = vmul.f32 %v1389, %v1389
        %v1408 = vmul.f32 %v1390, %v1390
        %v1409 = vmul.f32 %v1391, %v1391
        %v1410 = vmul.f32 %v1392, %v1392
        %v1411 = vmul.f32 %v1393, %v1393
        %v1412 = vmul.f32 %v1394, %v1394
        %v1413 = vmul.f32 %v1395, %v1395
        %v1414 = vmul.f32 %v1396, %v1396
        %v1415 = vmul.f32 %v1397, %v1397
        %v1416 = vmul.f32 %v1398, %v1398
        %v1417 = vmul.f32 %v1399, %v1399
        %v1418 = vmul.f32 %v1400, %v1400
        %v1419 = vmul.f32 %v1401, %v1401
        %v1420 = vmul.f32 %v1402, %v1402
        %v1421 = vadd.f32 %v1403, %v1412
        %v1422 = vadd.f32 %v1404, %v1413
        %v1423 = vadd.f32 %v1405, %v1414
        %v1424 = vadd.f32 %v1406, %v1415
        %v1425 = vadd.f32 %v1407, %v1416
        %v1426 = vadd.f32 %v1408, %v1417
        %v1427 = vadd.f32 %v1409, %v1418
        %v1428 = vadd.f32 %v1410, %v1419
        %v1429 = vadd.f32 %v1411, %v1420
        %v1430 = vld [vmem:[%s3] sm:$0xff]
        %v1431 = vld [vmem:[%s3 + $0x8] sm:$0xff]
        %v1432 = vld [vmem:[%s3 + $0x10] sm:$0xff]
        %v1433 = vld [vmem:[%s3 + $0x18] sm:$0xff]
        %vm1434 = vcmask 588800
        %v1436 = vsel %vm1434, %v1430, 0
        %v1439 = vsel %vm1434, %v1431, 0
        %v1442 = vsel %vm1434, %v1432, 0
        %v1445 = vsel %vm1434, %v1433, 0
        %1447 = vmatprep.subr.mxu0 0.0
        %1448 = vmatpush1.msra.mxu0 0.0
        %1449 = vmatprep.subr.mxu0 0.0
        %1450 = vmatpush1.msra.mxu0 0.0
        %1451 = vmatprep.subr.mxu0 0.0
        %1452 = vmatpush1.msra.mxu0 0.0
        %1453 = vmatprep.subr.mxu0 0.0
        %1454 = vmatpush1.msra.mxu0 0.0
        %1455 = vmatprep.subr.mxu0 0.0
        %1456 = vmatpush1.msra.mxu0 0.0
        %1457 = vmatprep.subr.mxu0 0.0
        %1458 = vmatpush1.msra.mxu0 0.0
        %1459 = vmatprep.subr.mxu0 0.0
        %1460 = vmatpush1.msra.mxu0 0.0
        %1461 = vmatprep.subr.mxu0 0.0
        %1462 = vmatpush1.msra.mxu0 %v1429
        %1463 = vmatprep.subr.mxu0 0.0
        %1464 = vmatpush1.msra.mxu0 %v1428
        %1465 = vmatprep.subr.mxu0 0.0
        %1466 = vmatpush1.msra.mxu0 %v1427
        %1467 = vmatprep.subr.mxu0 0.0
        %1468 = vmatpush1.msra.mxu0 %v1426
        %1469 = vmatprep.subr.mxu0 0.0
        %1470 = vmatpush1.msra.mxu0 %v1425
        %1471 = vmatprep.subr.mxu0 0.0
        %1472 = vmatpush1.msra.mxu0 %v1424
        %1473 = vmatprep.subr.mxu0 0.0
        %1474 = vmatpush1.msra.mxu0 %v1423
        %1475 = vmatprep.subr.mxu0 0.0
        %1476 = vmatpush1.msra.mxu0 %v1422
        %1477 = vmatprep.subr.mxu0 0.0
        %1478 = vmatpush1.msra.mxu0 %v1421
        %1479 = vmatprep.subr.mxu0 0.0
        %1480 = vmatpush2.msra.mxu0 0.0
        %1481 = vmatprep.subr.mxu0 0.0
        %1482 = vmatpush2.msra.mxu0 0.0
        %1483 = vmatprep.subr.mxu0 0.0
        %1484 = vmatpush2.msra.mxu0 0.0
        %1485 = vmatprep.subr.mxu0 0.0
        %1486 = vmatpush2.msra.mxu0 0.0
        %1487 = vmatprep.subr.mxu0 0.0
        %1488 = vmatpush2.msra.mxu0 0.0
        %1489 = vmatprep.subr.mxu0 0.0
        %1490 = vmatpush2.msra.mxu0 0.0
        %1491 = vmatprep.subr.mxu0 0.0
        %1492 = vmatpush2.msra.mxu0 0.0
        %1493 = vmatprep.subr.mxu0 0.0
        %1494 = vmatpush2.msra.mxu0 0.0
        %1495 = vmatprep.subr.mxu0 0.0
        %1496 = vmatpush2.msra.mxu0 0.0
        %1497 = vmatprep.subr.mxu0 0.0
        %1498 = vmatpush2.msra.mxu0 0.0
        %1499 = vmatprep.subr.mxu0 0.0
        %1500 = vmatpush2.msra.mxu0 0.0
        %1501 = vmatprep.subr.mxu0 0.0
        %1502 = vmatpush2.msra.mxu0 0.0
        %1503 = vmatprep.subr.mxu0 0.0
        %1504 = vmatpush2.msra.mxu0 0.0
        %1505 = vmatprep.subr.mxu0 0.0
        %1506 = vmatpush2.msra.mxu0 0.0
        %1507 = vmatprep.subr.mxu0 0.0
        %1508 = vmatpush2.msra.mxu0 0.0
        %1509 = vmatprep.subr.mxu0 0.0
        %1510 = vmatpush2.msra.mxu0 0.0
        %1511 = vmatprep.mubr.f32.mxu0 0.0
        %1512 = vmatmul.mubr.f32.gmra.mxu0 %v1436
        %v1513 = vpop.f32.mrf.mxu0
        %v1514 = vadd.f32 0.0, %v1513
        %v1515 = vpop.f32.mrf.mxu0
        %1516 = vmatprep.mubr.f32.mxu0 0.0
        %1517 = vmatmul.mubr.f32.gmra.mxu0 %v1439
        %v1518 = vpop.f32.mrf.mxu0
        %v1519 = vadd.f32 0.0, %v1518
        %v1520 = vpop.f32.mrf.mxu0
        %1521 = vmatprep.mubr.f32.mxu0 0.0
        %1522 = vmatmul.mubr.f32.gmra.mxu0 %v1442
        %v1523 = vpop.f32.mrf.mxu0
        %v1524 = vadd.f32 0.0, %v1523
        %v1525 = vpop.f32.mrf.mxu0
        %1526 = vmatprep.mubr.f32.mxu0 0.0
        %1527 = vmatmul.mubr.f32.gmra.mxu0 %v1445
        %v1528 = vpop.f32.mrf.mxu0
        %v1529 = vadd.f32 0.0, %v1528
        %v1530 = vpop.f32.mrf.mxu0
        %1531 = vdwg.mxu0
        %1532 = vst [vmem:[%s343] sm:$0xff] %v1514
        %1533 = vst [vmem:[%s343 + $0x8] sm:$0xff] %v1519
        %1534 = vst [vmem:[%s343 + $0x10] sm:$0xff] %v1524
        %1535 = vst [vmem:[%s343 + $0x18] sm:$0xff] %v1529
        %p1536 = scmp.lt.s32.totalorder %s19, 1
        %s1537 = scalar_select %p1536, %s19, 1
        %p1538 = scmp.lt.s32.totalorder %s20, 0
        %s1539 = scalar_select %p1538, %s20, 0
        %s1540 = smul.addr %s1537, 4
        %s1541 = sadd.s32 %s1539, %s1540
        %s1542 = smul.addr %s1541, 8
        %s1543 = scalar_lea.vmem %s4, %s1542
        // Predicated region
        $region113: #{_gammatonegram_forward.1} parent=103 // pred_check
          %p1544 = pneg %p147
        $region114: #{_gammatonegram_forward.1} parent=103 // pred_check_branch
          %1546 = sbr.rel (%p1544) target = $region116
        $region115: #{_gammatonegram_forward.1} parent=103 // pred_region
          _
        $region116: #{_gammatonegram_forward.1} parent=103 // pred_fallthru
          _
      $region104: #{_gammatonegram_forward.1} parent=5 // pred_fallthru
        _
      %p1547 = scmp.le.s32.totalorder 2, %s10
      // Predicated region
      $region117: #{_gammatonegram_forward.1} parent=5 // pred_check
        %p1548 = pneg %p1547
      $region118: #{_gammatonegram_forward.1} parent=5 // pred_check_branch
        %1550 = sbr.rel (%p1548) target = $region120
      $region119: #{_gammatonegram_forward.1} parent=5 // pred_region
        %s1551 = ssub.s32 %s10, 2
        // Predicated region
        $region121: #{_gammatonegram_forward.1} parent=119 // pred_check
          %p1552 = pneg %p153
        $region122: #{_gammatonegram_forward.1} parent=119 // pred_check_branch
          %1554 = sbr.rel (%p1552) target = $region124
        $region123: #{_gammatonegram_forward.1} parent=119 // pred_region
          %p1555 = scmp.lt.s32.totalorder %s21, 1
          %s1556 = scalar_select %p1555, %s21, 1
          %p1557 = scmp.lt.s32.totalorder %s22, 0
          %s1558 = scalar_select %p1557, %s22, 0
          %s1559 = smul.addr %s1556, 4
          %s1560 = sadd.s32 %s1558, %s1559
          %s1561 = smul.addr %s1560, 8
          %s1562 = scalar_lea.vmem %s4, %s1561
        $region124: #{_gammatonegram_forward.1} parent=119 // pred_fallthru
          _
      $region120: #{_gammatonegram_forward.1} parent=5 // pred_fallthru
        _
    $region6: #{_gammatonegram_forward.1} parent=1 // loop_footer
      %s14 = sadd.s32 1, %s10
    $region7: #{_gammatonegram_forward.1} parent=1 // loop_footer_branch
      %9 = sbr.rel target = $region3
    $region8: #{_gammatonegram_forward.1} parent=1 // loop_exit
      _

</llo_original>
